<compile_context>
chip_gen: v7x
topology: tpu7x:2x2x1
jax: 0.10.0
libtpu: 0.0.40
codegen_flags: <defaults>
</compile_context>

<pallas_src>
import functools
import math

import jax
import jax.numpy as jnp
from jax.experimental import pallas as pl
from jax.experimental.pallas import tpu as pltpu


# ---------------------------------------------------------------------------
# Fused Pallas kernel: full multiGAT_2layer forward
# ---------------------------------------------------------------------------

def multigat2_kernel(feat_ref, adj_ref,
                     g1w_ref, g1a_ref,          # gat1 heads:   [H, F, Fh], [H, Fh, 2]
                     w1o_ref, a1o_ref,          # gat1 out_att: [H, Fh, Fh], [Fh, 2]
                     w2_ref, a2_ref,            # gat2 head:    [Fh, OUT],  [OUT, 2]
                     w2o_ref, a2o_ref,          # gat2 out_att: [OUT, OUT], [OUT, 2]
                     out_ref, *, alpha, n_heads):
    # Shared masked-attention bias, computed ONCE for all (n_heads + 3) GAT layers.
    adj_bias = jnp.where(adj_ref[...] > 0, jnp.float32(0.0), jnp.float32(-1e12))

    def _elu(x):
        # exp on min(x,0) avoids inf under the select; matches nn.ELU() (alpha=1).
        return jnp.where(x > 0, x, jnp.exp(jnp.minimum(x, 0.0)) - 1.0)

    def gat_attend(h, a_cat):
        """Attention part of a GraphAttentionLayer given h = x @ W."""
        # a_cat is [out, 2]: col 0 = a[:out], col 1 = a[out:]
        f = jnp.dot(h, a_cat, preferred_element_type=jnp.float32)      # [N, 2]
        e = f[:, 0:1] + jnp.transpose(f[:, 1:2])                       # e[i,j] = f1_i + f2_j
        e = jnp.where(e > 0, e, alpha * e)                             # LeakyReLU(alpha)
        e = e + adj_bias                                               # mask (adj > 0)
        m = jnp.max(e, axis=1, keepdims=True)
        p = jnp.exp(e - m)
        inv = pl.reciprocal(jnp.sum(p, axis=1, keepdims=True), approx=True)
        attn = p * inv
        # TODO(synk): nn.Dropout on the attention matrix treated as identity (eval mode).
        return jnp.dot(attn, h, preferred_element_type=jnp.float32)    # [N, out]

    x = feat_ref[...]                                                  # [N, F]

    # ---- gat1: multi-head attention (concat=True -> per-head ELU) ----------
    head_outs = [
        _elu(gat_attend(jnp.dot(x, g1w_ref[hd], preferred_element_type=jnp.float32),
                        g1a_ref[hd]))
        for hd in range(n_heads)
    ]                                                                  # H x [N, Fh]

    # out_att input is concat(head_outs) @ W1o; computed as a sum of row-block
    # matmuls so the concat never has to be materialized on lanes.
    h1o = jnp.dot(head_outs[0], w1o_ref[0], preferred_element_type=jnp.float32)
    for hd in range(1, n_heads):
        h1o = h1o + jnp.dot(head_outs[hd], w1o_ref[hd],
                            preferred_element_type=jnp.float32)        # [N, Fh]

    x = _elu(gat_attend(h1o, a1o_ref[...]))   # out_att (concat=False) + outer F.elu
    x = _elu(x)                               # multiGAT_2layer.relu = nn.ELU()

    # ---- gat2: single head (concat=True) + out_att + outer ELU -------------
    x = _elu(gat_attend(jnp.dot(x, w2_ref[...], preferred_element_type=jnp.float32),
                        a2_ref[...]))                                  # [N, OUT]
    x = _elu(gat_attend(jnp.dot(x, w2o_ref[...], preferred_element_type=jnp.float32),
                        a2o_ref[...]))                                 # [N, OUT]

    out_ref[...] = x


# ---------------------------------------------------------------------------
# Wrapper: one pallas_call, all arrays as full-size VMEM blocks
# ---------------------------------------------------------------------------

def _full_spec(shape):
    nd = len(shape)
    return pl.BlockSpec(shape, lambda i, _nd=nd: (0,) * _nd)


def multigat_2layer_forward(params, feature, adj, *, alpha=0.2):
    n = feature.shape[0]
    n_heads = params["g1w"].shape[0]
    out_dim = params["w2o"].shape[1]

    args = (feature, adj,
            params["g1w"], params["g1a"],
            params["w1o"], params["a1o"],
            params["w2"], params["a2"],
            params["w2o"], params["a2o"])

    kernel = functools.partial(multigat2_kernel, alpha=alpha, n_heads=n_heads)
    return pl.pallas_call(
        kernel,
        out_shape=jax.ShapeDtypeStruct((n, out_dim), jnp.float32),
        grid=(1,),
        in_specs=[_full_spec(a.shape) for a in args],
        out_specs=_full_spec((n, out_dim)),
        compiler_params=pltpu.CompilerParams(dimension_semantics=("arbitrary",)),
    )(*args)


# ---------------------------------------------------------------------------
# Deterministic parameter init (shapes follow the PyTorch __init__)
# ---------------------------------------------------------------------------

def xavier_uniform(key, shape, gain=1.414):
    fan_in, fan_out = shape
    bound = gain * math.sqrt(6.0 / (fan_in + fan_out))
    return jax.random.uniform(key, shape, jnp.float32, -bound, bound)


def gat_params(key, in_features, out_features):
    k_w, k_a = jax.random.split(key)
    w = xavier_uniform(k_w, (in_features, out_features))
    a = xavier_uniform(k_a, (2 * out_features, 1))                 # PyTorch layout
    a_cat = jnp.concatenate([a[:out_features], a[out_features:]], axis=1)  # [out, 2]
    return w, a_cat


def init_multigat_2layer(key, input_feature_len, out_put, head):
    f_h = input_feature_len // head
    keys = jax.random.split(key, head + 3)

    head_ws, head_as = [], []
    for i in range(head):
        w, a = gat_params(keys[i], input_feature_len, f_h)         # F -> F/head
        head_ws.append(w)
        head_as.append(a)
    g1w = jnp.stack(head_ws)                                       # [H, F, Fh]
    g1a = jnp.stack(head_as)                                       # [H, Fh, 2]

    w1o, a1o = gat_params(keys[head], input_feature_len, f_h)      # (Fh*H=F) -> Fh
    w1o = w1o.reshape(head, f_h, f_h)                              # row-blocked per head

    w2, a2 = gat_params(keys[head + 1], f_h, out_put)              # Fh -> OUT
    w2o, a2o = gat_params(keys[head + 2], out_put, out_put)        # OUT -> OUT

    return dict(g1w=g1w, g1a=g1a, w1o=w1o, a1o=a1o,
                w2=w2, a2=a2, w2o=w2o, a2o=a2o)


# ---------------------------------------------------------------------------
# Pure-JAX reference (for correctness check in main)
# ---------------------------------------------------------------------------

def _ref_gat(x, w, a_cat, adj, alpha, concat):
    h = x @ w
    f = h @ a_cat
    e = f[:, 0:1] + f[:, 1:2].T
    e = jnp.where(e > 0, e, alpha * e)
    e = jnp.where(adj > 0, e, jnp.float32(-1e12))
    attn = jax.nn.softmax(e, axis=1)
    hp = attn @ h
    return jax.nn.elu(hp) if concat else hp


def _reference_forward(params, feature, adj, alpha):
    n_heads = params["g1w"].shape[0]
    f_h = params["w1o"].shape[1]
    heads = [_ref_gat(feature, params["g1w"][h], params["g1a"][h], adj, alpha, True)
             for h in range(n_heads)]
    x = jnp.concatenate(heads, axis=1)
    w1o_full = params["w1o"].reshape(n_heads * f_h, f_h)
    x = jax.nn.elu(_ref_gat(x, w1o_full, params["a1o"], adj, alpha, False))
    x = jax.nn.elu(x)
    x = _ref_gat(x, params["w2"], params["a2"], adj, alpha, True)
    x = jax.nn.elu(_ref_gat(x, params["w2o"], params["a2o"], adj, alpha, False))
    return x


# ---------------------------------------------------------------------------
# Main
# ---------------------------------------------------------------------------

if __name__ == "__main__":
    N = 8          # graph nodes
    F_LEN = 32     # input_feature_len
    HEAD = 4       # heads in gat1  (F/head = 8)
    OUT = 16       # out_put
    ALPHA = 0.2    # LeakyReLU slope
    # TODO(synk): F.dropout / nn.Dropout are identity here (eval mode / drop=0);
    # training-mode stochastic dropout is not reproduced.

    key = jax.random.PRNGKey(0)
    k_param, k_feat, k_adj = jax.random.split(key, 3)

    params = init_multigat_2layer(k_param, F_LEN, OUT, HEAD)

    feature = jax.random.normal(k_feat, (N, F_LEN), jnp.float32)
    adj = (jax.random.uniform(k_adj, (N, N)) > 0.5).astype(jnp.float32)
    adj = jnp.maximum(adj, jnp.eye(N, dtype=jnp.float32))      # keep self-loops

    out = multigat_2layer_forward(params, feature, adj, alpha=ALPHA)
    jax.block_until_ready(out)

    assert out.shape == (N, OUT)
    assert bool(jnp.all(jnp.isfinite(out)))

    ref = _reference_forward(params, feature, adj, ALPHA)
    assert bool(jnp.allclose(out, ref, rtol=5e-2, atol=5e-2)), \
        f"max abs diff {float(jnp.max(jnp.abs(out - ref)))}"

    print("KERNEL_OK")
</pallas_src>

<mosaic_0001>
module attributes {stable_mosaic.version = 11 : i64} {
  func.func @multigat2_kernel(%arg0: i32, %arg1: memref<8x32xf32, #tpu.memory_space<vmem>>, %arg2: memref<8x8xf32, #tpu.memory_space<vmem>>, %arg3: memref<4x32x8xf32, #tpu.memory_space<vmem>>, %arg4: memref<4x8x2xf32, #tpu.memory_space<vmem>>, %arg5: memref<4x8x8xf32, #tpu.memory_space<vmem>>, %arg6: memref<8x2xf32, #tpu.memory_space<vmem>>, %arg7: memref<8x16xf32, #tpu.memory_space<vmem>>, %arg8: memref<16x2xf32, #tpu.memory_space<vmem>>, %arg9: memref<16x16xf32, #tpu.memory_space<vmem>>, %arg10: memref<16x2xf32, #tpu.memory_space<vmem>>, %arg11: memref<8x16xf32, #tpu.memory_space<vmem>>) attributes {dimension_semantics = [#tpu.dimension_semantics<arbitrary>], iteration_bounds = array<i64: 1>, scalar_prefetch = 0 : i64, scratch_operands = 0 : i64, tpu.core_type = #tpu.core_type<tc>, window_params = [{pipeline_mode = #tpu.pipeline_mode<synchronous>, transform_indices = @transform_0, window_bounds = array<i64: 8, 32>}, {pipeline_mode = #tpu.pipeline_mode<synchronous>, transform_indices = @transform_1, window_bounds = array<i64: 8, 8>}, {pipeline_mode = #tpu.pipeline_mode<synchronous>, transform_indices = @transform_2, window_bounds = array<i64: 4, 32, 8>}, {pipeline_mode = #tpu.pipeline_mode<synchronous>, transform_indices = @transform_3, window_bounds = array<i64: 4, 8, 2>}, {pipeline_mode = #tpu.pipeline_mode<synchronous>, transform_indices = @transform_4, window_bounds = array<i64: 4, 8, 8>}, {pipeline_mode = #tpu.pipeline_mode<synchronous>, transform_indices = @transform_5, window_bounds = array<i64: 8, 2>}, {pipeline_mode = #tpu.pipeline_mode<synchronous>, transform_indices = @transform_6, window_bounds = array<i64: 8, 16>}, {pipeline_mode = #tpu.pipeline_mode<synchronous>, transform_indices = @transform_7, window_bounds = array<i64: 16, 2>}, {pipeline_mode = #tpu.pipeline_mode<synchronous>, transform_indices = @transform_8, window_bounds = array<i64: 16, 16>}, {pipeline_mode = #tpu.pipeline_mode<synchronous>, transform_indices = @transform_9, window_bounds = array<i64: 16, 2>}, {pipeline_mode = #tpu.pipeline_mode<synchronous>, transform_indices = @transform_10, window_bounds = array<i64: 8, 16>}]} {
    %c0 = arith.constant 0 : index
    %c0_0 = arith.constant 0 : index
    %0 = vector.load %arg2[%c0, %c0_0] : memref<8x8xf32, #tpu.memory_space<vmem>>, vector<8x8xf32>
    %cst = arith.constant 0.000000e+00 : f32
    %1 = vector.broadcast %cst : f32 to vector<8x8xf32>
    %2 = arith.cmpf ogt, %0, %1 : vector<8x8xf32>
    %cst_1 = arith.constant 0.000000e+00 : f32
    %cst_2 = arith.constant -9.99999995E+11 : f32
    %3 = vector.broadcast %cst_1 : f32 to vector<8x8xf32>
    %4 = vector.broadcast %cst_2 : f32 to vector<8x8xf32>
    %5 = arith.select %2, %3, %4 : vector<8x8xi1>, vector<8x8xf32>
    %c0_3 = arith.constant 0 : index
    %c0_4 = arith.constant 0 : index
    %6 = vector.load %arg1[%c0_3, %c0_4] : memref<8x32xf32, #tpu.memory_space<vmem>>, vector<8x32xf32>
    %c0_5 = arith.constant 0 : index
    %c0_6 = arith.constant 0 : index
    %c0_7 = arith.constant 0 : index
    %7 = vector.load %arg3[%c0_5, %c0_6, %c0_7] : memref<4x32x8xf32, #tpu.memory_space<vmem>>, vector<1x32x8xf32>
    %8 = vector.shape_cast %7 : vector<1x32x8xf32> to vector<32x8xf32>
    %cst_8 = arith.constant dense<0.000000e+00> : vector<8x8xf32>
    %9 = tpu.matmul %6, %8, %cst_8 {dimension_numbers = #tpu.dot_dimension_numbers<[1], [0], [0], [1], [0, 0, 1, 1], [], []>} : vector<8x32xf32>, vector<32x8xf32>, vector<8x8xf32> -> vector<8x8xf32>
    %c0_9 = arith.constant 0 : index
    %c0_10 = arith.constant 0 : index
    %c0_11 = arith.constant 0 : index
    %10 = vector.load %arg4[%c0_9, %c0_10, %c0_11] : memref<4x8x2xf32, #tpu.memory_space<vmem>>, vector<1x8x2xf32>
    %11 = vector.shape_cast %10 : vector<1x8x2xf32> to vector<8x2xf32>
    %cst_12 = arith.constant dense<0.000000e+00> : vector<8x2xf32>
    %12 = tpu.matmul %9, %11, %cst_12 {dimension_numbers = #tpu.dot_dimension_numbers<[1], [0], [0], [1], [0, 0, 1, 1], [], []>} : vector<8x8xf32>, vector<8x2xf32>, vector<8x2xf32> -> vector<8x2xf32>
    %13 = vector.extract_strided_slice %12 {offsets = [0, 0], sizes = [8, 1], strides = [1, 1]} : vector<8x2xf32> to vector<8x1xf32>
    %14 = vector.extract_strided_slice %12 {offsets = [0, 1], sizes = [8, 1], strides = [1, 1]} : vector<8x2xf32> to vector<8x1xf32>
    %15 = tpu.transpose %14, [1, 0] : vector<8x1xf32> -> vector<1x8xf32>
    %16 = vector.broadcast %13 : vector<8x1xf32> to vector<8x8xf32>
    %17 = vector.broadcast %15 : vector<1x8xf32> to vector<8x8xf32>
    %18 = arith.addf %16, %17 : vector<8x8xf32>
    %cst_13 = arith.constant 0.000000e+00 : f32
    %19 = vector.broadcast %cst_13 : f32 to vector<8x8xf32>
    %20 = arith.cmpf ogt, %18, %19 : vector<8x8xf32>
    %cst_14 = arith.constant 2.000000e-01 : f32
    %21 = vector.broadcast %cst_14 : f32 to vector<8x8xf32>
    %22 = arith.mulf %21, %18 : vector<8x8xf32>
    %23 = arith.select %20, %18, %22 : vector<8x8xi1>, vector<8x8xf32>
    %24 = arith.addf %23, %5 : vector<8x8xf32>
    %cst_15 = arith.constant dense<0xFF800000> : vector<8xf32>
    %25 = vector.multi_reduction <maximumf>, %24, %cst_15 [1] : vector<8x8xf32> to vector<8xf32>
    %26 = vector.shape_cast %25 : vector<8xf32> to vector<8x1xf32>
    %27 = vector.broadcast %26 : vector<8x1xf32> to vector<8x8xf32>
    %28 = arith.subf %24, %27 : vector<8x8xf32>
    %29 = math.exp %28 : vector<8x8xf32>
    %cst_16 = arith.constant dense<0.000000e+00> : vector<8xf32>
    %30 = vector.multi_reduction <add>, %29, %cst_16 [1] : vector<8x8xf32> to vector<8xf32>
    %31 = vector.shape_cast %30 : vector<8xf32> to vector<8x1xf32>
    %32 = tpu.reciprocal %31 {approx = true} : vector<8x1xf32> -> vector<8x1xf32>
    %33 = vector.broadcast %32 : vector<8x1xf32> to vector<8x8xf32>
    %34 = arith.mulf %29, %33 : vector<8x8xf32>
    %cst_17 = arith.constant dense<0.000000e+00> : vector<8x8xf32>
    %35 = tpu.matmul %34, %9, %cst_17 {dimension_numbers = #tpu.dot_dimension_numbers<[1], [0], [0], [1], [0, 0, 1, 1], [], []>} : vector<8x8xf32>, vector<8x8xf32>, vector<8x8xf32> -> vector<8x8xf32>
    %cst_18 = arith.constant 0.000000e+00 : f32
    %36 = vector.broadcast %cst_18 : f32 to vector<8x8xf32>
    %37 = arith.cmpf ogt, %35, %36 : vector<8x8xf32>
    %cst_19 = arith.constant 0.000000e+00 : f32
    %38 = vector.broadcast %cst_19 : f32 to vector<8x8xf32>
    %39 = arith.minimumf %35, %38 : vector<8x8xf32>
    %40 = math.exp %39 : vector<8x8xf32>
    %cst_20 = arith.constant 1.000000e+00 : f32
    %41 = vector.broadcast %cst_20 : f32 to vector<8x8xf32>
    %42 = arith.subf %40, %41 : vector<8x8xf32>
    %43 = arith.select %37, %35, %42 : vector<8x8xi1>, vector<8x8xf32>
    %c1 = arith.constant 1 : index
    %c0_21 = arith.constant 0 : index
    %c0_22 = arith.constant 0 : index
    %44 = vector.load %arg3[%c1, %c0_21, %c0_22] : memref<4x32x8xf32, #tpu.memory_space<vmem>>, vector<1x32x8xf32>
    %45 = vector.shape_cast %44 : vector<1x32x8xf32> to vector<32x8xf32>
    %cst_23 = arith.constant dense<0.000000e+00> : vector<8x8xf32>
    %46 = tpu.matmul %6, %45, %cst_23 {dimension_numbers = #tpu.dot_dimension_numbers<[1], [0], [0], [1], [0, 0, 1, 1], [], []>} : vector<8x32xf32>, vector<32x8xf32>, vector<8x8xf32> -> vector<8x8xf32>
    %c1_24 = arith.constant 1 : index
    %c0_25 = arith.constant 0 : index
    %c0_26 = arith.constant 0 : index
    %47 = vector.load %arg4[%c1_24, %c0_25, %c0_26] : memref<4x8x2xf32, #tpu.memory_space<vmem>>, vector<1x8x2xf32>
    %48 = vector.shape_cast %47 : vector<1x8x2xf32> to vector<8x2xf32>
    %cst_27 = arith.constant dense<0.000000e+00> : vector<8x2xf32>
    %49 = tpu.matmul %46, %48, %cst_27 {dimension_numbers = #tpu.dot_dimension_numbers<[1], [0], [0], [1], [0, 0, 1, 1], [], []>} : vector<8x8xf32>, vector<8x2xf32>, vector<8x2xf32> -> vector<8x2xf32>
    %50 = vector.extract_strided_slice %49 {offsets = [0, 0], sizes = [8, 1], strides = [1, 1]} : vector<8x2xf32> to vector<8x1xf32>
    %51 = vector.extract_strided_slice %49 {offsets = [0, 1], sizes = [8, 1], strides = [1, 1]} : vector<8x2xf32> to vector<8x1xf32>
    %52 = tpu.transpose %51, [1, 0] : vector<8x1xf32> -> vector<1x8xf32>
    %53 = vector.broadcast %50 : vector<8x1xf32> to vector<8x8xf32>
    %54 = vector.broadcast %52 : vector<1x8xf32> to vector<8x8xf32>
    %55 = arith.addf %53, %54 : vector<8x8xf32>
    %cst_28 = arith.constant 0.000000e+00 : f32
    %56 = vector.broadcast %cst_28 : f32 to vector<8x8xf32>
    %57 = arith.cmpf ogt, %55, %56 : vector<8x8xf32>
    %cst_29 = arith.constant 2.000000e-01 : f32
    %58 = vector.broadcast %cst_29 : f32 to vector<8x8xf32>
    %59 = arith.mulf %58, %55 : vector<8x8xf32>
    %60 = arith.select %57, %55, %59 : vector<8x8xi1>, vector<8x8xf32>
    %61 = arith.addf %60, %5 : vector<8x8xf32>
    %cst_30 = arith.constant dense<0xFF800000> : vector<8xf32>
    %62 = vector.multi_reduction <maximumf>, %61, %cst_30 [1] : vector<8x8xf32> to vector<8xf32>
    %63 = vector.shape_cast %62 : vector<8xf32> to vector<8x1xf32>
    %64 = vector.broadcast %63 : vector<8x1xf32> to vector<8x8xf32>
    %65 = arith.subf %61, %64 : vector<8x8xf32>
    %66 = math.exp %65 : vector<8x8xf32>
    %cst_31 = arith.constant dense<0.000000e+00> : vector<8xf32>
    %67 = vector.multi_reduction <add>, %66, %cst_31 [1] : vector<8x8xf32> to vector<8xf32>
    %68 = vector.shape_cast %67 : vector<8xf32> to vector<8x1xf32>
    %69 = tpu.reciprocal %68 {approx = true} : vector<8x1xf32> -> vector<8x1xf32>
    %70 = vector.broadcast %69 : vector<8x1xf32> to vector<8x8xf32>
    %71 = arith.mulf %66, %70 : vector<8x8xf32>
    %cst_32 = arith.constant dense<0.000000e+00> : vector<8x8xf32>
    %72 = tpu.matmul %71, %46, %cst_32 {dimension_numbers = #tpu.dot_dimension_numbers<[1], [0], [0], [1], [0, 0, 1, 1], [], []>} : vector<8x8xf32>, vector<8x8xf32>, vector<8x8xf32> -> vector<8x8xf32>
    %cst_33 = arith.constant 0.000000e+00 : f32
    %73 = vector.broadcast %cst_33 : f32 to vector<8x8xf32>
    %74 = arith.cmpf ogt, %72, %73 : vector<8x8xf32>
    %cst_34 = arith.constant 0.000000e+00 : f32
    %75 = vector.broadcast %cst_34 : f32 to vector<8x8xf32>
    %76 = arith.minimumf %72, %75 : vector<8x8xf32>
    %77 = math.exp %76 : vector<8x8xf32>
    %cst_35 = arith.constant 1.000000e+00 : f32
    %78 = vector.broadcast %cst_35 : f32 to vector<8x8xf32>
    %79 = arith.subf %77, %78 : vector<8x8xf32>
    %80 = arith.select %74, %72, %79 : vector<8x8xi1>, vector<8x8xf32>
    %c2 = arith.constant 2 : index
    %c0_36 = arith.constant 0 : index
    %c0_37 = arith.constant 0 : index
    %81 = vector.load %arg3[%c2, %c0_36, %c0_37] : memref<4x32x8xf32, #tpu.memory_space<vmem>>, vector<1x32x8xf32>
    %82 = vector.shape_cast %81 : vector<1x32x8xf32> to vector<32x8xf32>
    %cst_38 = arith.constant dense<0.000000e+00> : vector<8x8xf32>
    %83 = tpu.matmul %6, %82, %cst_38 {dimension_numbers = #tpu.dot_dimension_numbers<[1], [0], [0], [1], [0, 0, 1, 1], [], []>} : vector<8x32xf32>, vector<32x8xf32>, vector<8x8xf32> -> vector<8x8xf32>
    %c2_39 = arith.constant 2 : index
    %c0_40 = arith.constant 0 : index
    %c0_41 = arith.constant 0 : index
    %84 = vector.load %arg4[%c2_39, %c0_40, %c0_41] : memref<4x8x2xf32, #tpu.memory_space<vmem>>, vector<1x8x2xf32>
    %85 = vector.shape_cast %84 : vector<1x8x2xf32> to vector<8x2xf32>
    %cst_42 = arith.constant dense<0.000000e+00> : vector<8x2xf32>
    %86 = tpu.matmul %83, %85, %cst_42 {dimension_numbers = #tpu.dot_dimension_numbers<[1], [0], [0], [1], [0, 0, 1, 1], [], []>} : vector<8x8xf32>, vector<8x2xf32>, vector<8x2xf32> -> vector<8x2xf32>
    %87 = vector.extract_strided_slice %86 {offsets = [0, 0], sizes = [8, 1], strides = [1, 1]} : vector<8x2xf32> to vector<8x1xf32>
    %88 = vector.extract_strided_slice %86 {offsets = [0, 1], sizes = [8, 1], strides = [1, 1]} : vector<8x2xf32> to vector<8x1xf32>
    %89 = tpu.transpose %88, [1, 0] : vector<8x1xf32> -> vector<1x8xf32>
    %90 = vector.broadcast %87 : vector<8x1xf32> to vector<8x8xf32>
    %91 = vector.broadcast %89 : vector<1x8xf32> to vector<8x8xf32>
    %92 = arith.addf %90, %91 : vector<8x8xf32>
    %cst_43 = arith.constant 0.000000e+00 : f32
    %93 = vector.broadcast %cst_43 : f32 to vector<8x8xf32>
    %94 = arith.cmpf ogt, %92, %93 : vector<8x8xf32>
    %cst_44 = arith.constant 2.000000e-01 : f32
    %95 = vector.broadcast %cst_44 : f32 to vector<8x8xf32>
    %96 = arith.mulf %95, %92 : vector<8x8xf32>
    %97 = arith.select %94, %92, %96 : vector<8x8xi1>, vector<8x8xf32>
    %98 = arith.addf %97, %5 : vector<8x8xf32>
    %cst_45 = arith.constant dense<0xFF800000> : vector<8xf32>
    %99 = vector.multi_reduction <maximumf>, %98, %cst_45 [1] : vector<8x8xf32> to vector<8xf32>
    %100 = vector.shape_cast %99 : vector<8xf32> to vector<8x1xf32>
    %101 = vector.broadcast %100 : vector<8x1xf32> to vector<8x8xf32>
    %102 = arith.subf %98, %101 : vector<8x8xf32>
    %103 = math.exp %102 : vector<8x8xf32>
    %cst_46 = arith.constant dense<0.000000e+00> : vector<8xf32>
    %104 = vector.multi_reduction <add>, %103, %cst_46 [1] : vector<8x8xf32> to vector<8xf32>
    %105 = vector.shape_cast %104 : vector<8xf32> to vector<8x1xf32>
    %106 = tpu.reciprocal %105 {approx = true} : vector<8x1xf32> -> vector<8x1xf32>
    %107 = vector.broadcast %106 : vector<8x1xf32> to vector<8x8xf32>
    %108 = arith.mulf %103, %107 : vector<8x8xf32>
    %cst_47 = arith.constant dense<0.000000e+00> : vector<8x8xf32>
    %109 = tpu.matmul %108, %83, %cst_47 {dimension_numbers = #tpu.dot_dimension_numbers<[1], [0], [0], [1], [0, 0, 1, 1], [], []>} : vector<8x8xf32>, vector<8x8xf32>, vector<8x8xf32> -> vector<8x8xf32>
    %cst_48 = arith.constant 0.000000e+00 : f32
    %110 = vector.broadcast %cst_48 : f32 to vector<8x8xf32>
    %111 = arith.cmpf ogt, %109, %110 : vector<8x8xf32>
    %cst_49 = arith.constant 0.000000e+00 : f32
    %112 = vector.broadcast %cst_49 : f32 to vector<8x8xf32>
    %113 = arith.minimumf %109, %112 : vector<8x8xf32>
    %114 = math.exp %113 : vector<8x8xf32>
    %cst_50 = arith.constant 1.000000e+00 : f32
    %115 = vector.broadcast %cst_50 : f32 to vector<8x8xf32>
    %116 = arith.subf %114, %115 : vector<8x8xf32>
    %117 = arith.select %111, %109, %116 : vector<8x8xi1>, vector<8x8xf32>
    %c3 = arith.constant 3 : index
    %c0_51 = arith.constant 0 : index
    %c0_52 = arith.constant 0 : index
    %118 = vector.load %arg3[%c3, %c0_51, %c0_52] : memref<4x32x8xf32, #tpu.memory_space<vmem>>, vector<1x32x8xf32>
    %119 = vector.shape_cast %118 : vector<1x32x8xf32> to vector<32x8xf32>
    %cst_53 = arith.constant dense<0.000000e+00> : vector<8x8xf32>
    %120 = tpu.matmul %6, %119, %cst_53 {dimension_numbers = #tpu.dot_dimension_numbers<[1], [0], [0], [1], [0, 0, 1, 1], [], []>} : vector<8x32xf32>, vector<32x8xf32>, vector<8x8xf32> -> vector<8x8xf32>
    %c3_54 = arith.constant 3 : index
    %c0_55 = arith.constant 0 : index
    %c0_56 = arith.constant 0 : index
    %121 = vector.load %arg4[%c3_54, %c0_55, %c0_56] : memref<4x8x2xf32, #tpu.memory_space<vmem>>, vector<1x8x2xf32>
    %122 = vector.shape_cast %121 : vector<1x8x2xf32> to vector<8x2xf32>
    %cst_57 = arith.constant dense<0.000000e+00> : vector<8x2xf32>
    %123 = tpu.matmul %120, %122, %cst_57 {dimension_numbers = #tpu.dot_dimension_numbers<[1], [0], [0], [1], [0, 0, 1, 1], [], []>} : vector<8x8xf32>, vector<8x2xf32>, vector<8x2xf32> -> vector<8x2xf32>
    %124 = vector.extract_strided_slice %123 {offsets = [0, 0], sizes = [8, 1], strides = [1, 1]} : vector<8x2xf32> to vector<8x1xf32>
    %125 = vector.extract_strided_slice %123 {offsets = [0, 1], sizes = [8, 1], strides = [1, 1]} : vector<8x2xf32> to vector<8x1xf32>
    %126 = tpu.transpose %125, [1, 0] : vector<8x1xf32> -> vector<1x8xf32>
    %127 = vector.broadcast %124 : vector<8x1xf32> to vector<8x8xf32>
    %128 = vector.broadcast %126 : vector<1x8xf32> to vector<8x8xf32>
    %129 = arith.addf %127, %128 : vector<8x8xf32>
    %cst_58 = arith.constant 0.000000e+00 : f32
    %130 = vector.broadcast %cst_58 : f32 to vector<8x8xf32>
    %131 = arith.cmpf ogt, %129, %130 : vector<8x8xf32>
    %cst_59 = arith.constant 2.000000e-01 : f32
    %132 = vector.broadcast %cst_59 : f32 to vector<8x8xf32>
    %133 = arith.mulf %132, %129 : vector<8x8xf32>
    %134 = arith.select %131, %129, %133 : vector<8x8xi1>, vector<8x8xf32>
    %135 = arith.addf %134, %5 : vector<8x8xf32>
    %cst_60 = arith.constant dense<0xFF800000> : vector<8xf32>
    %136 = vector.multi_reduction <maximumf>, %135, %cst_60 [1] : vector<8x8xf32> to vector<8xf32>
    %137 = vector.shape_cast %136 : vector<8xf32> to vector<8x1xf32>
    %138 = vector.broadcast %137 : vector<8x1xf32> to vector<8x8xf32>
    %139 = arith.subf %135, %138 : vector<8x8xf32>
    %140 = math.exp %139 : vector<8x8xf32>
    %cst_61 = arith.constant dense<0.000000e+00> : vector<8xf32>
    %141 = vector.multi_reduction <add>, %140, %cst_61 [1] : vector<8x8xf32> to vector<8xf32>
    %142 = vector.shape_cast %141 : vector<8xf32> to vector<8x1xf32>
    %143 = tpu.reciprocal %142 {approx = true} : vector<8x1xf32> -> vector<8x1xf32>
    %144 = vector.broadcast %143 : vector<8x1xf32> to vector<8x8xf32>
    %145 = arith.mulf %140, %144 : vector<8x8xf32>
    %cst_62 = arith.constant dense<0.000000e+00> : vector<8x8xf32>
    %146 = tpu.matmul %145, %120, %cst_62 {dimension_numbers = #tpu.dot_dimension_numbers<[1], [0], [0], [1], [0, 0, 1, 1], [], []>} : vector<8x8xf32>, vector<8x8xf32>, vector<8x8xf32> -> vector<8x8xf32>
    %cst_63 = arith.constant 0.000000e+00 : f32
    %147 = vector.broadcast %cst_63 : f32 to vector<8x8xf32>
    %148 = arith.cmpf ogt, %146, %147 : vector<8x8xf32>
    %cst_64 = arith.constant 0.000000e+00 : f32
    %149 = vector.broadcast %cst_64 : f32 to vector<8x8xf32>
    %150 = arith.minimumf %146, %149 : vector<8x8xf32>
    %151 = math.exp %150 : vector<8x8xf32>
    %cst_65 = arith.constant 1.000000e+00 : f32
    %152 = vector.broadcast %cst_65 : f32 to vector<8x8xf32>
    %153 = arith.subf %151, %152 : vector<8x8xf32>
    %154 = arith.select %148, %146, %153 : vector<8x8xi1>, vector<8x8xf32>
    %c0_66 = arith.constant 0 : index
    %c0_67 = arith.constant 0 : index
    %c0_68 = arith.constant 0 : index
    %155 = vector.load %arg5[%c0_66, %c0_67, %c0_68] : memref<4x8x8xf32, #tpu.memory_space<vmem>>, vector<1x8x8xf32>
    %156 = vector.shape_cast %155 : vector<1x8x8xf32> to vector<8x8xf32>
    %cst_69 = arith.constant dense<0.000000e+00> : vector<8x8xf32>
    %157 = tpu.matmul %43, %156, %cst_69 {dimension_numbers = #tpu.dot_dimension_numbers<[1], [0], [0], [1], [0, 0, 1, 1], [], []>} : vector<8x8xf32>, vector<8x8xf32>, vector<8x8xf32> -> vector<8x8xf32>
    %c1_70 = arith.constant 1 : index
    %c0_71 = arith.constant 0 : index
    %c0_72 = arith.constant 0 : index
    %158 = vector.load %arg5[%c1_70, %c0_71, %c0_72] : memref<4x8x8xf32, #tpu.memory_space<vmem>>, vector<1x8x8xf32>
    %159 = vector.shape_cast %158 : vector<1x8x8xf32> to vector<8x8xf32>
    %cst_73 = arith.constant dense<0.000000e+00> : vector<8x8xf32>
    %160 = tpu.matmul %80, %159, %cst_73 {dimension_numbers = #tpu.dot_dimension_numbers<[1], [0], [0], [1], [0, 0, 1, 1], [], []>} : vector<8x8xf32>, vector<8x8xf32>, vector<8x8xf32> -> vector<8x8xf32>
    %161 = arith.addf %157, %160 : vector<8x8xf32>
    %c2_74 = arith.constant 2 : index
    %c0_75 = arith.constant 0 : index
    %c0_76 = arith.constant 0 : index
    %162 = vector.load %arg5[%c2_74, %c0_75, %c0_76] : memref<4x8x8xf32, #tpu.memory_space<vmem>>, vector<1x8x8xf32>
    %163 = vector.shape_cast %162 : vector<1x8x8xf32> to vector<8x8xf32>
    %cst_77 = arith.constant dense<0.000000e+00> : vector<8x8xf32>
    %164 = tpu.matmul %117, %163, %cst_77 {dimension_numbers = #tpu.dot_dimension_numbers<[1], [0], [0], [1], [0, 0, 1, 1], [], []>} : vector<8x8xf32>, vector<8x8xf32>, vector<8x8xf32> -> vector<8x8xf32>
    %165 = arith.addf %161, %164 : vector<8x8xf32>
    %c3_78 = arith.constant 3 : index
    %c0_79 = arith.constant 0 : index
    %c0_80 = arith.constant 0 : index
    %166 = vector.load %arg5[%c3_78, %c0_79, %c0_80] : memref<4x8x8xf32, #tpu.memory_space<vmem>>, vector<1x8x8xf32>
    %167 = vector.shape_cast %166 : vector<1x8x8xf32> to vector<8x8xf32>
    %cst_81 = arith.constant dense<0.000000e+00> : vector<8x8xf32>
    %168 = tpu.matmul %154, %167, %cst_81 {dimension_numbers = #tpu.dot_dimension_numbers<[1], [0], [0], [1], [0, 0, 1, 1], [], []>} : vector<8x8xf32>, vector<8x8xf32>, vector<8x8xf32> -> vector<8x8xf32>
    %169 = arith.addf %165, %168 : vector<8x8xf32>
    %c0_82 = arith.constant 0 : index
    %c0_83 = arith.constant 0 : index
    %170 = vector.load %arg6[%c0_82, %c0_83] : memref<8x2xf32, #tpu.memory_space<vmem>>, vector<8x2xf32>
    %cst_84 = arith.constant dense<0.000000e+00> : vector<8x2xf32>
    %171 = tpu.matmul %169, %170, %cst_84 {dimension_numbers = #tpu.dot_dimension_numbers<[1], [0], [0], [1], [0, 0, 1, 1], [], []>} : vector<8x8xf32>, vector<8x2xf32>, vector<8x2xf32> -> vector<8x2xf32>
    %172 = vector.extract_strided_slice %171 {offsets = [0, 0], sizes = [8, 1], strides = [1, 1]} : vector<8x2xf32> to vector<8x1xf32>
    %173 = vector.extract_strided_slice %171 {offsets = [0, 1], sizes = [8, 1], strides = [1, 1]} : vector<8x2xf32> to vector<8x1xf32>
    %174 = tpu.transpose %173, [1, 0] : vector<8x1xf32> -> vector<1x8xf32>
    %175 = vector.broadcast %172 : vector<8x1xf32> to vector<8x8xf32>
    %176 = vector.broadcast %174 : vector<1x8xf32> to vector<8x8xf32>
    %177 = arith.addf %175, %176 : vector<8x8xf32>
    %cst_85 = arith.constant 0.000000e+00 : f32
    %178 = vector.broadcast %cst_85 : f32 to vector<8x8xf32>
    %179 = arith.cmpf ogt, %177, %178 : vector<8x8xf32>
    %cst_86 = arith.constant 2.000000e-01 : f32
    %180 = vector.broadcast %cst_86 : f32 to vector<8x8xf32>
    %181 = arith.mulf %180, %177 : vector<8x8xf32>
    %182 = arith.select %179, %177, %181 : vector<8x8xi1>, vector<8x8xf32>
    %183 = arith.addf %182, %5 : vector<8x8xf32>
    %cst_87 = arith.constant dense<0xFF800000> : vector<8xf32>
    %184 = vector.multi_reduction <maximumf>, %183, %cst_87 [1] : vector<8x8xf32> to vector<8xf32>
    %185 = vector.shape_cast %184 : vector<8xf32> to vector<8x1xf32>
    %186 = vector.broadcast %185 : vector<8x1xf32> to vector<8x8xf32>
    %187 = arith.subf %183, %186 : vector<8x8xf32>
    %188 = math.exp %187 : vector<8x8xf32>
    %cst_88 = arith.constant dense<0.000000e+00> : vector<8xf32>
    %189 = vector.multi_reduction <add>, %188, %cst_88 [1] : vector<8x8xf32> to vector<8xf32>
    %190 = vector.shape_cast %189 : vector<8xf32> to vector<8x1xf32>
    %191 = tpu.reciprocal %190 {approx = true} : vector<8x1xf32> -> vector<8x1xf32>
    %192 = vector.broadcast %191 : vector<8x1xf32> to vector<8x8xf32>
    %193 = arith.mulf %188, %192 : vector<8x8xf32>
    %cst_89 = arith.constant dense<0.000000e+00> : vector<8x8xf32>
    %194 = tpu.matmul %193, %169, %cst_89 {dimension_numbers = #tpu.dot_dimension_numbers<[1], [0], [0], [1], [0, 0, 1, 1], [], []>} : vector<8x8xf32>, vector<8x8xf32>, vector<8x8xf32> -> vector<8x8xf32>
    %cst_90 = arith.constant 0.000000e+00 : f32
    %195 = vector.broadcast %cst_90 : f32 to vector<8x8xf32>
    %196 = arith.cmpf ogt, %194, %195 : vector<8x8xf32>
    %cst_91 = arith.constant 0.000000e+00 : f32
    %197 = vector.broadcast %cst_91 : f32 to vector<8x8xf32>
    %198 = arith.minimumf %194, %197 : vector<8x8xf32>
    %199 = math.exp %198 : vector<8x8xf32>
    %cst_92 = arith.constant 1.000000e+00 : f32
    %200 = vector.broadcast %cst_92 : f32 to vector<8x8xf32>
    %201 = arith.subf %199, %200 : vector<8x8xf32>
    %202 = arith.select %196, %194, %201 : vector<8x8xi1>, vector<8x8xf32>
    %cst_93 = arith.constant 0.000000e+00 : f32
    %203 = vector.broadcast %cst_93 : f32 to vector<8x8xf32>
    %204 = arith.cmpf ogt, %202, %203 : vector<8x8xf32>
    %cst_94 = arith.constant 0.000000e+00 : f32
    %205 = vector.broadcast %cst_94 : f32 to vector<8x8xf32>
    %206 = arith.minimumf %202, %205 : vector<8x8xf32>
    %207 = math.exp %206 : vector<8x8xf32>
    %cst_95 = arith.constant 1.000000e+00 : f32
    %208 = vector.broadcast %cst_95 : f32 to vector<8x8xf32>
    %209 = arith.subf %207, %208 : vector<8x8xf32>
    %210 = arith.select %204, %202, %209 : vector<8x8xi1>, vector<8x8xf32>
    %c0_96 = arith.constant 0 : index
    %c0_97 = arith.constant 0 : index
    %211 = vector.load %arg7[%c0_96, %c0_97] : memref<8x16xf32, #tpu.memory_space<vmem>>, vector<8x16xf32>
    %cst_98 = arith.constant dense<0.000000e+00> : vector<8x16xf32>
    %212 = tpu.matmul %210, %211, %cst_98 {dimension_numbers = #tpu.dot_dimension_numbers<[1], [0], [0], [1], [0, 0, 1, 1], [], []>} : vector<8x8xf32>, vector<8x16xf32>, vector<8x16xf32> -> vector<8x16xf32>
    %c0_99 = arith.constant 0 : index
    %c0_100 = arith.constant 0 : index
    %213 = vector.load %arg8[%c0_99, %c0_100] : memref<16x2xf32, #tpu.memory_space<vmem>>, vector<16x2xf32>
    %cst_101 = arith.constant dense<0.000000e+00> : vector<8x2xf32>
    %214 = tpu.matmul %212, %213, %cst_101 {dimension_numbers = #tpu.dot_dimension_numbers<[1], [0], [0], [1], [0, 0, 1, 1], [], []>} : vector<8x16xf32>, vector<16x2xf32>, vector<8x2xf32> -> vector<8x2xf32>
    %215 = vector.extract_strided_slice %214 {offsets = [0, 0], sizes = [8, 1], strides = [1, 1]} : vector<8x2xf32> to vector<8x1xf32>
    %216 = vector.extract_strided_slice %214 {offsets = [0, 1], sizes = [8, 1], strides = [1, 1]} : vector<8x2xf32> to vector<8x1xf32>
    %217 = tpu.transpose %216, [1, 0] : vector<8x1xf32> -> vector<1x8xf32>
    %218 = vector.broadcast %215 : vector<8x1xf32> to vector<8x8xf32>
    %219 = vector.broadcast %217 : vector<1x8xf32> to vector<8x8xf32>
    %220 = arith.addf %218, %219 : vector<8x8xf32>
    %cst_102 = arith.constant 0.000000e+00 : f32
    %221 = vector.broadcast %cst_102 : f32 to vector<8x8xf32>
    %222 = arith.cmpf ogt, %220, %221 : vector<8x8xf32>
    %cst_103 = arith.constant 2.000000e-01 : f32
    %223 = vector.broadcast %cst_103 : f32 to vector<8x8xf32>
    %224 = arith.mulf %223, %220 : vector<8x8xf32>
    %225 = arith.select %222, %220, %224 : vector<8x8xi1>, vector<8x8xf32>
    %226 = arith.addf %225, %5 : vector<8x8xf32>
    %cst_104 = arith.constant dense<0xFF800000> : vector<8xf32>
    %227 = vector.multi_reduction <maximumf>, %226, %cst_104 [1] : vector<8x8xf32> to vector<8xf32>
    %228 = vector.shape_cast %227 : vector<8xf32> to vector<8x1xf32>
    %229 = vector.broadcast %228 : vector<8x1xf32> to vector<8x8xf32>
    %230 = arith.subf %226, %229 : vector<8x8xf32>
    %231 = math.exp %230 : vector<8x8xf32>
    %cst_105 = arith.constant dense<0.000000e+00> : vector<8xf32>
    %232 = vector.multi_reduction <add>, %231, %cst_105 [1] : vector<8x8xf32> to vector<8xf32>
    %233 = vector.shape_cast %232 : vector<8xf32> to vector<8x1xf32>
    %234 = tpu.reciprocal %233 {approx = true} : vector<8x1xf32> -> vector<8x1xf32>
    %235 = vector.broadcast %234 : vector<8x1xf32> to vector<8x8xf32>
    %236 = arith.mulf %231, %235 : vector<8x8xf32>
    %cst_106 = arith.constant dense<0.000000e+00> : vector<8x16xf32>
    %237 = tpu.matmul %236, %212, %cst_106 {dimension_numbers = #tpu.dot_dimension_numbers<[1], [0], [0], [1], [0, 0, 1, 1], [], []>} : vector<8x8xf32>, vector<8x16xf32>, vector<8x16xf32> -> vector<8x16xf32>
    %cst_107 = arith.constant 0.000000e+00 : f32
    %238 = vector.broadcast %cst_107 : f32 to vector<8x16xf32>
    %239 = arith.cmpf ogt, %237, %238 : vector<8x16xf32>
    %cst_108 = arith.constant 0.000000e+00 : f32
    %240 = vector.broadcast %cst_108 : f32 to vector<8x16xf32>
    %241 = arith.minimumf %237, %240 : vector<8x16xf32>
    %242 = math.exp %241 : vector<8x16xf32>
    %cst_109 = arith.constant 1.000000e+00 : f32
    %243 = vector.broadcast %cst_109 : f32 to vector<8x16xf32>
    %244 = arith.subf %242, %243 : vector<8x16xf32>
    %245 = arith.select %239, %237, %244 : vector<8x16xi1>, vector<8x16xf32>
    %c0_110 = arith.constant 0 : index
    %c0_111 = arith.constant 0 : index
    %246 = vector.load %arg9[%c0_110, %c0_111] : memref<16x16xf32, #tpu.memory_space<vmem>>, vector<16x16xf32>
    %cst_112 = arith.constant dense<0.000000e+00> : vector<8x16xf32>
    %247 = tpu.matmul %245, %246, %cst_112 {dimension_numbers = #tpu.dot_dimension_numbers<[1], [0], [0], [1], [0, 0, 1, 1], [], []>} : vector<8x16xf32>, vector<16x16xf32>, vector<8x16xf32> -> vector<8x16xf32>
    %c0_113 = arith.constant 0 : index
    %c0_114 = arith.constant 0 : index
    %248 = vector.load %arg10[%c0_113, %c0_114] : memref<16x2xf32, #tpu.memory_space<vmem>>, vector<16x2xf32>
    %cst_115 = arith.constant dense<0.000000e+00> : vector<8x2xf32>
    %249 = tpu.matmul %247, %248, %cst_115 {dimension_numbers = #tpu.dot_dimension_numbers<[1], [0], [0], [1], [0, 0, 1, 1], [], []>} : vector<8x16xf32>, vector<16x2xf32>, vector<8x2xf32> -> vector<8x2xf32>
    %250 = vector.extract_strided_slice %249 {offsets = [0, 0], sizes = [8, 1], strides = [1, 1]} : vector<8x2xf32> to vector<8x1xf32>
    %251 = vector.extract_strided_slice %249 {offsets = [0, 1], sizes = [8, 1], strides = [1, 1]} : vector<8x2xf32> to vector<8x1xf32>
    %252 = tpu.transpose %251, [1, 0] : vector<8x1xf32> -> vector<1x8xf32>
    %253 = vector.broadcast %250 : vector<8x1xf32> to vector<8x8xf32>
    %254 = vector.broadcast %252 : vector<1x8xf32> to vector<8x8xf32>
    %255 = arith.addf %253, %254 : vector<8x8xf32>
    %cst_116 = arith.constant 0.000000e+00 : f32
    %256 = vector.broadcast %cst_116 : f32 to vector<8x8xf32>
    %257 = arith.cmpf ogt, %255, %256 : vector<8x8xf32>
    %cst_117 = arith.constant 2.000000e-01 : f32
    %258 = vector.broadcast %cst_117 : f32 to vector<8x8xf32>
    %259 = arith.mulf %258, %255 : vector<8x8xf32>
    %260 = arith.select %257, %255, %259 : vector<8x8xi1>, vector<8x8xf32>
    %261 = arith.addf %260, %5 : vector<8x8xf32>
    %cst_118 = arith.constant dense<0xFF800000> : vector<8xf32>
    %262 = vector.multi_reduction <maximumf>, %261, %cst_118 [1] : vector<8x8xf32> to vector<8xf32>
    %263 = vector.shape_cast %262 : vector<8xf32> to vector<8x1xf32>
    %264 = vector.broadcast %263 : vector<8x1xf32> to vector<8x8xf32>
    %265 = arith.subf %261, %264 : vector<8x8xf32>
    %266 = math.exp %265 : vector<8x8xf32>
    %cst_119 = arith.constant dense<0.000000e+00> : vector<8xf32>
    %267 = vector.multi_reduction <add>, %266, %cst_119 [1] : vector<8x8xf32> to vector<8xf32>
    %268 = vector.shape_cast %267 : vector<8xf32> to vector<8x1xf32>
    %269 = tpu.reciprocal %268 {approx = true} : vector<8x1xf32> -> vector<8x1xf32>
    %270 = vector.broadcast %269 : vector<8x1xf32> to vector<8x8xf32>
    %271 = arith.mulf %266, %270 : vector<8x8xf32>
    %cst_120 = arith.constant dense<0.000000e+00> : vector<8x16xf32>
    %272 = tpu.matmul %271, %247, %cst_120 {dimension_numbers = #tpu.dot_dimension_numbers<[1], [0], [0], [1], [0, 0, 1, 1], [], []>} : vector<8x8xf32>, vector<8x16xf32>, vector<8x16xf32> -> vector<8x16xf32>
    %cst_121 = arith.constant 0.000000e+00 : f32
    %273 = vector.broadcast %cst_121 : f32 to vector<8x16xf32>
    %274 = arith.cmpf ogt, %272, %273 : vector<8x16xf32>
    %cst_122 = arith.constant 0.000000e+00 : f32
    %275 = vector.broadcast %cst_122 : f32 to vector<8x16xf32>
    %276 = arith.minimumf %272, %275 : vector<8x16xf32>
    %277 = math.exp %276 : vector<8x16xf32>
    %cst_123 = arith.constant 1.000000e+00 : f32
    %278 = vector.broadcast %cst_123 : f32 to vector<8x16xf32>
    %279 = arith.subf %277, %278 : vector<8x16xf32>
    %280 = arith.select %274, %272, %279 : vector<8x16xi1>, vector<8x16xf32>
    %c0_124 = arith.constant 0 : index
    %c0_125 = arith.constant 0 : index
    %281 = vector.load %arg11[%c0_124, %c0_125] : memref<8x16xf32, #tpu.memory_space<vmem>>, vector<8x16xf32>
    tpu.vector_store %arg11[%c0_124, %c0_125], %280 {strides = array<i32>} : memref<8x16xf32, #tpu.memory_space<vmem>>, vector<8x16xf32>,
    return
  }
  func.func @transform_0(%arg0: i32) -> (i32, i32) {
    %c0_i32 = arith.constant 0 : i32
    %c0_i32_0 = arith.constant 0 : i32
    %c0_i32_1 = arith.constant 0 : i32
    return %c0_i32, %c0_i32_0 : i32, i32
  }
  func.func @transform_1(%arg0: i32) -> (i32, i32) {
    %c0_i32 = arith.constant 0 : i32
    %c0_i32_0 = arith.constant 0 : i32
    %c0_i32_1 = arith.constant 0 : i32
    return %c0_i32, %c0_i32_0 : i32, i32
  }
  func.func @transform_2(%arg0: i32) -> (i32, i32, i32) {
    %c0_i32 = arith.constant 0 : i32
    %c0_i32_0 = arith.constant 0 : i32
    %c0_i32_1 = arith.constant 0 : i32
    %c0_i32_2 = arith.constant 0 : i32
    return %c0_i32, %c0_i32_0, %c0_i32_1 : i32, i32, i32
  }
  func.func @transform_3(%arg0: i32) -> (i32, i32, i32) {
    %c0_i32 = arith.constant 0 : i32
    %c0_i32_0 = arith.constant 0 : i32
    %c0_i32_1 = arith.constant 0 : i32
    %c0_i32_2 = arith.constant 0 : i32
    return %c0_i32, %c0_i32_0, %c0_i32_1 : i32, i32, i32
  }
  func.func @transform_4(%arg0: i32) -> (i32, i32, i32) {
    %c0_i32 = arith.constant 0 : i32
    %c0_i32_0 = arith.constant 0 : i32
    %c0_i32_1 = arith.constant 0 : i32
    %c0_i32_2 = arith.constant 0 : i32
    return %c0_i32, %c0_i32_0, %c0_i32_1 : i32, i32, i32
  }
  func.func @transform_5(%arg0: i32) -> (i32, i32) {
    %c0_i32 = arith.constant 0 : i32
    %c0_i32_0 = arith.constant 0 : i32
    %c0_i32_1 = arith.constant 0 : i32
    return %c0_i32, %c0_i32_0 : i32, i32
  }
  func.func @transform_6(%arg0: i32) -> (i32, i32) {
    %c0_i32 = arith.constant 0 : i32
    %c0_i32_0 = arith.constant 0 : i32
    %c0_i32_1 = arith.constant 0 : i32
    return %c0_i32, %c0_i32_0 : i32, i32
  }
  func.func @transform_7(%arg0: i32) -> (i32, i32) {
    %c0_i32 = arith.constant 0 : i32
    %c0_i32_0 = arith.constant 0 : i32
    %c0_i32_1 = arith.constant 0 : i32
    return %c0_i32, %c0_i32_0 : i32, i32
  }
  func.func @transform_8(%arg0: i32) -> (i32, i32) {
    %c0_i32 = arith.constant 0 : i32
    %c0_i32_0 = arith.constant 0 : i32
    %c0_i32_1 = arith.constant 0 : i32
    return %c0_i32, %c0_i32_0 : i32, i32
  }
  func.func @transform_9(%arg0: i32) -> (i32, i32) {
    %c0_i32 = arith.constant 0 : i32
    %c0_i32_0 = arith.constant 0 : i32
    %c0_i32_1 = arith.constant 0 : i32
    return %c0_i32, %c0_i32_0 : i32, i32
  }
  func.func @transform_10(%arg0: i32) -> (i32, i32) {
    %c0_i32 = arith.constant 0 : i32
    %c0_i32_0 = arith.constant 0 : i32
    %c0_i32_1 = arith.constant 0 : i32
    return %c0_i32, %c0_i32_0 : i32, i32
  }
}

</mosaic_0001>

<llo_original>
// kernel: tpu_custom_call.1
$region0: #{tpu_custom_call.1}
  #allocation0 [shape = 'u32[]', space=smem, size = 0x4, offset = 0x4, fixed_abs, tag = 'smem constant byte address 0x4 - core index']
  #allocation1 [shape = 'u32[144,128]{1,0:T(1,128)}', space=vmem, size = 0x12000, scoped, tag = 'internal scratch']
  %s0 = inlined_call_operand.vmem [shape: f32[8,32], index: 0, kind: input, shape index: {}]
  %s1 = inlined_call_operand.vmem [shape: f32[8,8], index: 1, kind: input, shape index: {}]
  %s2 = inlined_call_operand.vmem [shape: f32[4,32,8], index: 2, kind: input, shape index: {}]
  %s3 = inlined_call_operand.vmem [shape: f32[4,8,2], index: 3, kind: input, shape index: {}]
  %s4 = inlined_call_operand.vmem [shape: f32[4,8,8], index: 4, kind: input, shape index: {}]
  %s5 = inlined_call_operand.vmem [shape: f32[8,2], index: 5, kind: input, shape index: {}]
  %s6 = inlined_call_operand.vmem [shape: f32[8,16], index: 6, kind: input, shape index: {}]
  %s7 = inlined_call_operand.vmem [shape: f32[16,2], index: 7, kind: input, shape index: {}]
  %s8 = inlined_call_operand.vmem [shape: f32[16,16], index: 8, kind: input, shape index: {}]
  %s9 = inlined_call_operand.vmem [shape: f32[16,2], index: 9, kind: input, shape index: {}]
  %s10 = inlined_call_operand.hbm [shape: f32[8,16], index: 10, kind: output, shape index: {}]
  %s11 = sld [smem:[#allocation0]]
  $region50: #{tpu_custom_call.1} parent=0
    _
  %s13 = ssub.s32 1, %s11
  %s14 = scalar_select 0, %s13, %s11
  $region1: #{tpu_custom_call.1} parent=0
    #allocation2 [shape = 'u8[4096]{0}', space=vmem, size = 0x1000, scoped, tag = 'output window, operand 0, single buffered']
    #allocation3 [shape = 's32[1]{0}', space=sflag, size = 0x4, scoped, tag = 'scoped memory for tpu_custom_call.1']
    %15 = vsyncpa [#allocation3], 0
    // Predicated region
    $region2: #{tpu_custom_call.1} parent=1 // pred_check
      _
    $region3: #{tpu_custom_call.1} parent=1 // pred_check_branch
      %17 = sbr.rel (0) target = $region5
    $region4: #{tpu_custom_call.1} parent=1 // pred_region
      _
    $region5: #{tpu_custom_call.1} parent=1 // pred_fallthru
      _
    // Predicated region
    $region6: #{tpu_custom_call.1} parent=1 // pred_check
      _
    $region7: #{tpu_custom_call.1} parent=1 // pred_check_branch
      %19 = sbr.rel (0) target = $region9
    $region8: #{tpu_custom_call.1} parent=1 // pred_region
      _
    $region9: #{tpu_custom_call.1} parent=1 // pred_fallthru
      _
    // Predicated region
    $region10: #{tpu_custom_call.1} parent=1 // pred_check
      _
    $region11: #{tpu_custom_call.1} parent=1 // pred_check_branch
      %21 = sbr.rel (0) target = $region13
    $region12: #{tpu_custom_call.1} parent=1 // pred_region
      _
    $region13: #{tpu_custom_call.1} parent=1 // pred_fallthru
      _
    // Predicated region
    $region14: #{tpu_custom_call.1} parent=1 // pred_check
      _
    $region15: #{tpu_custom_call.1} parent=1 // pred_check_branch
      %23 = sbr.rel (0) target = $region17
    $region16: #{tpu_custom_call.1} parent=1 // pred_region
      _
    $region17: #{tpu_custom_call.1} parent=1 // pred_fallthru
      _
    // Predicated region
    $region18: #{tpu_custom_call.1} parent=1 // pred_check
      _
    $region19: #{tpu_custom_call.1} parent=1 // pred_check_branch
      %25 = sbr.rel (0) target = $region21
    $region20: #{tpu_custom_call.1} parent=1 // pred_region
      _
    $region21: #{tpu_custom_call.1} parent=1 // pred_fallthru
      _
    // Predicated region
    $region22: #{tpu_custom_call.1} parent=1 // pred_check
      _
    $region23: #{tpu_custom_call.1} parent=1 // pred_check_branch
      %27 = sbr.rel (0) target = $region25
    $region24: #{tpu_custom_call.1} parent=1 // pred_region
      _
    $region25: #{tpu_custom_call.1} parent=1 // pred_fallthru
      _
    // Predicated region
    $region26: #{tpu_custom_call.1} parent=1 // pred_check
      _
    $region27: #{tpu_custom_call.1} parent=1 // pred_check_branch
      %29 = sbr.rel (0) target = $region29
    $region28: #{tpu_custom_call.1} parent=1 // pred_region
      _
    $region29: #{tpu_custom_call.1} parent=1 // pred_fallthru
      _
    // Predicated region
    $region30: #{tpu_custom_call.1} parent=1 // pred_check
      _
    $region31: #{tpu_custom_call.1} parent=1 // pred_check_branch
      %31 = sbr.rel (0) target = $region33
    $region32: #{tpu_custom_call.1} parent=1 // pred_region
      _
    $region33: #{tpu_custom_call.1} parent=1 // pred_fallthru
      _
    // Predicated region
    $region34: #{tpu_custom_call.1} parent=1 // pred_check
      _
    $region35: #{tpu_custom_call.1} parent=1 // pred_check_branch
      %33 = sbr.rel (0) target = $region37
    $region36: #{tpu_custom_call.1} parent=1 // pred_region
      _
    $region37: #{tpu_custom_call.1} parent=1 // pred_fallthru
      _
    // Predicated region
    $region38: #{tpu_custom_call.1} parent=1 // pred_check
      _
    $region39: #{tpu_custom_call.1} parent=1 // pred_check_branch
      %35 = sbr.rel (0) target = $region41
    $region40: #{tpu_custom_call.1} parent=1 // pred_region
      _
    $region41: #{tpu_custom_call.1} parent=1 // pred_fallthru
      _
    %v36 = vld [vmem:[%s1] sm:$0xff]
    %vm37 = vcmp.gt.f32.partialorder %v36, 0.0
    %v38 = vsel %vm37, 0.0, -1e+12
    %v39 = vld [vmem:[%s0] sm:$0xff]
    %v40 = vld [vmem:[%s2] sm:$0xff]
    %v41 = vld [vmem:[%s2 + $0x8] sm:$0xff]
    %v42 = vld [vmem:[%s2 + $0x10] sm:$0xff]
    %v43 = vld [vmem:[%s2 + $0x18] sm:$0xff]
    %vm44 = vcmask 261120
    %v46 = vsel %vm44, %v39, 0
    %48 = vmatprep.subr.mxu0 0.0
    %49 = vmatpush1.msra.mxu0 %v40
    %50 = vmatprep.subr.mxu0 0.0
    %51 = vmatpush1.msra.mxu0 %v41
    %52 = vmatprep.subr.mxu0 0.0
    %53 = vmatpush1.msra.mxu0 %v42
    %54 = vmatprep.subr.mxu0 0.0
    %55 = vmatpush1.msra.mxu0 %v43
    %56 = vmatprep.subr.mxu0 0.0
    %57 = vmatpush1.msra.mxu0 0.0
    %58 = vmatprep.subr.mxu0 0.0
    %59 = vmatpush1.msra.mxu0 0.0
    %60 = vmatprep.subr.mxu0 0.0
    %61 = vmatpush1.msra.mxu0 0.0
    %62 = vmatprep.subr.mxu0 0.0
    %63 = vmatpush1.msra.mxu0 0.0
    %64 = vmatprep.subr.mxu0 0.0
    %65 = vmatpush1.msra.mxu0 0.0
    %66 = vmatprep.subr.mxu0 0.0
    %67 = vmatpush1.msra.mxu0 0.0
    %68 = vmatprep.subr.mxu0 0.0
    %69 = vmatpush1.msra.mxu0 0.0
    %70 = vmatprep.subr.mxu0 0.0
    %71 = vmatpush1.msra.mxu0 0.0
    %72 = vmatprep.subr.mxu0 0.0
    %73 = vmatpush1.msra.mxu0 0.0
    %74 = vmatprep.subr.mxu0 0.0
    %75 = vmatpush1.msra.mxu0 0.0
    %76 = vmatprep.subr.mxu0 0.0
    %77 = vmatpush1.msra.mxu0 0.0
    %78 = vmatprep.subr.mxu0 0.0
    %79 = vmatpush1.msra.mxu0 0.0
    %80 = vmatprep.subr.mxu0 0.0
    %81 = vmatpush1.msra.mxu0 0.0
    %82 = vmatprep.subr.mxu0 0.0
    %83 = vmatpush1.msra.mxu0 0.0
    %84 = vmatprep.subr.mxu0 0.0
    %85 = vmatpush1.msra.mxu0 0.0
    %86 = vmatprep.subr.mxu0 0.0
    %87 = vmatpush1.msra.mxu0 0.0
    %88 = vmatprep.subr.mxu0 0.0
    %89 = vmatpush1.msra.mxu0 0.0
    %90 = vmatprep.subr.mxu0 0.0
    %91 = vmatpush1.msra.mxu0 0.0
    %92 = vmatprep.subr.mxu0 0.0
    %93 = vmatpush1.msra.mxu0 0.0
    %94 = vmatprep.subr.mxu0 0.0
    %95 = vmatpush1.msra.mxu0 0.0
    %96 = vmatprep.subr.mxu0 0.0
    %97 = vmatpush1.msra.mxu0 0.0
    %98 = vmatprep.subr.mxu0 0.0
    %99 = vmatpush1.msra.mxu0 0.0
    %100 = vmatprep.subr.mxu0 0.0
    %101 = vmatpush1.msra.mxu0 0.0
    %102 = vmatprep.subr.mxu0 0.0
    %103 = vmatpush1.msra.mxu0 0.0
    %104 = vmatprep.subr.mxu0 0.0
    %105 = vmatpush1.msra.mxu0 0.0
    %106 = vmatprep.subr.mxu0 0.0
    %107 = vmatpush1.msra.mxu0 0.0
    %108 = vmatprep.subr.mxu0 0.0
    %109 = vmatpush1.msra.mxu0 0.0
    %110 = vmatprep.subr.mxu0 0.0
    %111 = vmatpush1.msra.mxu0 0.0
    %112 = vmatprep.mubr.f32.mxu0 0.0
    %113 = vmatmul.mubr.f32.gmra.mrb[0].mxu0 %v46
    %v114 = vpop.f32.mrb[0].mxu0
    %v115 = vadd.f32 0.0, %v114
    %v116 = vpop.f32.mrb[0].mxu0
    %117 = vdwg.mxu0
    %v118 = vld [vmem:[%s3] sm:$0xff]
    %vm119 = vcmask 64512
    %v121 = vsel %vm119, %v115, 0
    %123 = vmatprep.subr.mxu0 0.0
    %124 = vmatpush1.msra.mxu0 %v118
    %125 = vmatprep.subr.mxu0 0.0
    %126 = vmatpush1.msra.mxu0 0.0
    %127 = vmatprep.subr.mxu0 0.0
    %128 = vmatpush1.msra.mxu0 0.0
    %129 = vmatprep.subr.mxu0 0.0
    %130 = vmatpush1.msra.mxu0 0.0
    %131 = vmatprep.subr.mxu0 0.0
    %132 = vmatpush1.msra.mxu0 0.0
    %133 = vmatprep.subr.mxu0 0.0
    %134 = vmatpush1.msra.mxu0 0.0
    %135 = vmatprep.subr.mxu0 0.0
    %136 = vmatpush1.msra.mxu0 0.0
    %137 = vmatprep.subr.mxu0 0.0
    %138 = vmatpush1.msra.mxu0 0.0
    %139 = vmatprep.subr.mxu0 0.0
    %140 = vmatpush1.msra.mxu0 0.0
    %141 = vmatprep.subr.mxu0 0.0
    %142 = vmatpush1.msra.mxu0 0.0
    %143 = vmatprep.subr.mxu0 0.0
    %144 = vmatpush1.msra.mxu0 0.0
    %145 = vmatprep.subr.mxu0 0.0
    %146 = vmatpush1.msra.mxu0 0.0
    %147 = vmatprep.subr.mxu0 0.0
    %148 = vmatpush1.msra.mxu0 0.0
    %149 = vmatprep.subr.mxu0 0.0
    %150 = vmatpush1.msra.mxu0 0.0
    %151 = vmatprep.subr.mxu0 0.0
    %152 = vmatpush1.msra.mxu0 0.0
    %153 = vmatprep.subr.mxu0 0.0
    %154 = vmatpush1.msra.mxu0 0.0
    %155 = vmatprep.subr.mxu0 0.0
    %156 = vmatpush1.msra.mxu0 0.0
    %157 = vmatprep.subr.mxu0 0.0
    %158 = vmatpush1.msra.mxu0 0.0
    %159 = vmatprep.subr.mxu0 0.0
    %160 = vmatpush1.msra.mxu0 0.0
    %161 = vmatprep.subr.mxu0 0.0
    %162 = vmatpush1.msra.mxu0 0.0
    %163 = vmatprep.subr.mxu0 0.0
    %164 = vmatpush1.msra.mxu0 0.0
    %165 = vmatprep.subr.mxu0 0.0
    %166 = vmatpush1.msra.mxu0 0.0
    %167 = vmatprep.subr.mxu0 0.0
    %168 = vmatpush1.msra.mxu0 0.0
    %169 = vmatprep.subr.mxu0 0.0
    %170 = vmatpush1.msra.mxu0 0.0
    %171 = vmatprep.subr.mxu0 0.0
    %172 = vmatpush1.msra.mxu0 0.0
    %173 = vmatprep.subr.mxu0 0.0
    %174 = vmatpush1.msra.mxu0 0.0
    %175 = vmatprep.subr.mxu0 0.0
    %176 = vmatpush1.msra.mxu0 0.0
    %177 = vmatprep.subr.mxu0 0.0
    %178 = vmatpush1.msra.mxu0 0.0
    %179 = vmatprep.subr.mxu0 0.0
    %180 = vmatpush1.msra.mxu0 0.0
    %181 = vmatprep.subr.mxu0 0.0
    %182 = vmatpush1.msra.mxu0 0.0
    %183 = vmatprep.subr.mxu0 0.0
    %184 = vmatpush1.msra.mxu0 0.0
    %185 = vmatprep.subr.mxu0 0.0
    %186 = vmatpush1.msra.mxu0 0.0
    %187 = vmatprep.mubr.f32.mxu0 0.0
    %188 = vmatmul.mubr.f32.gmra.mrb[0].mxu0 %v121
    %v189 = vpop.f32.mrb[0].mxu0
    %v190 = vadd.f32 0.0, %v189
    %v191 = vpop.f32.mrb[0].mxu0
    %192 = vdwg.mxu0
    %194 = vrot.lane.b32.xlu0 %v190, 127
    %v195 = vpop.permute.xlu0 %194
    %197 = vxpose.xlu0.b32.start [1/16] %v195, 128
    %198 = vxpose.xlu0.b32.cont [2/16] 0.0, 128
    %199 = vxpose.xlu0.b32.cont [3/16] 0.0, 128
    %200 = vxpose.xlu0.b32.cont [4/16] 0.0, 128
    %201 = vxpose.xlu0.b32.cont [5/16] 0.0, 128
    %202 = vxpose.xlu0.b32.cont [6/16] 0.0, 128
    %203 = vxpose.xlu0.b32.cont [7/16] 0.0, 128
    %204 = vxpose.xlu0.b32.cont [8/16] 0.0, 128
    %205 = vxpose.xlu0.b32.cont [9/16] 0.0, 128
    %206 = vxpose.xlu0.b32.cont [10/16] 0.0, 128
    %207 = vxpose.xlu0.b32.cont [11/16] 0.0, 128
    %208 = vxpose.xlu0.b32.cont [12/16] 0.0, 128
    %209 = vxpose.xlu0.b32.cont [13/16] 0.0, 128
    %210 = vxpose.xlu0.b32.cont [14/16] 0.0, 128
    %211 = vxpose.xlu0.b32.cont [15/16] 0.0, 128
    %212 = vxpose.xlu0.b32.end [16/16] 0.0, 128
    %v213 = vpop.trf.xlu0
    %v214 = vpop.trf.xlu0
    %v215 = vpop.trf.xlu0
    %v216 = vpop.trf.xlu0
    %v217 = vpop.trf.xlu0
    %v218 = vpop.trf.xlu0
    %v219 = vpop.trf.xlu0
    %v220 = vpop.trf.xlu0
    %v221 = vpop.trf.xlu0
    %v222 = vpop.trf.xlu0
    %v223 = vpop.trf.xlu0
    %v224 = vpop.trf.xlu0
    %v225 = vpop.trf.xlu0
    %v226 = vpop.trf.xlu0
    %v227 = vpop.trf.xlu0
    %v228 = vpop.trf.xlu0
    %229 = vset.pattern.permute.xlu0 0
    %230 = vperm.xlu0 %229, %v190
    %v231 = vpop.permute.xlu0 %230
    %v233 = vlaneseq
    %v234 = vshrl.u32 %v233, 7
    %v235 = vsub.s32 0, %v234
    %v236 = vrot.slane %v213, %v235
    %v237 = vadd.f32 %v231, %v236
    %vm238 = vcmp.gt.f32.partialorder %v237, 0.0
    %v239 = vmul.f32 %v237, 0.2
    %v240 = vsel %vm238, %v237, %v239
    %v241 = vadd.f32 %v240, %v38
    %v242 = vsel %vm119, %v241, -inf
    %243 = vmax.xlane.f32.xlu0 %v242
    %v244 = vpop.xlane.xlu0 %243
    %v245 = vsub.f32 %v241, %v244
    %v246 = vmul.f32 %v245, 1.442695
    %v247 = vpow.pop %v246
    %v248 = vsel %vm119, %v247, 0.0
    %249 = vadd.xlane.f32.xlu0 %v248
    %v250 = vpop.xlane.xlu0 %249
    %v251 = vrcp.pop %v250
    %v252 = vmul.f32 %v247, %v251
    %v254 = vsel %vm119, %v252, 0
    %256 = vmatprep.subr.mxu0 0.0
    %257 = vmatpush1.msra.mxu0 %v115
    %258 = vmatprep.subr.mxu0 0.0
    %259 = vmatpush1.msra.mxu0 0.0
    %260 = vmatprep.subr.mxu0 0.0
    %261 = vmatpush1.msra.mxu0 0.0
    %262 = vmatprep.subr.mxu0 0.0
    %263 = vmatpush1.msra.mxu0 0.0
    %264 = vmatprep.subr.mxu0 0.0
    %265 = vmatpush1.msra.mxu0 0.0
    %266 = vmatprep.subr.mxu0 0.0
    %267 = vmatpush1.msra.mxu0 0.0
    %268 = vmatprep.subr.mxu0 0.0
    %269 = vmatpush1.msra.mxu0 0.0
    %270 = vmatprep.subr.mxu0 0.0
    %271 = vmatpush1.msra.mxu0 0.0
    %272 = vmatprep.subr.mxu0 0.0
    %273 = vmatpush1.msra.mxu0 0.0
    %274 = vmatprep.subr.mxu0 0.0
    %275 = vmatpush1.msra.mxu0 0.0
    %276 = vmatprep.subr.mxu0 0.0
    %277 = vmatpush1.msra.mxu0 0.0
    %278 = vmatprep.subr.mxu0 0.0
    %279 = vmatpush1.msra.mxu0 0.0
    %280 = vmatprep.subr.mxu0 0.0
    %281 = vmatpush1.msra.mxu0 0.0
    %282 = vmatprep.subr.mxu0 0.0
    %283 = vmatpush1.msra.mxu0 0.0
    %284 = vmatprep.subr.mxu0 0.0
    %285 = vmatpush1.msra.mxu0 0.0
    %286 = vmatprep.subr.mxu0 0.0
    %287 = vmatpush1.msra.mxu0 0.0
    %288 = vmatprep.subr.mxu0 0.0
    %289 = vmatpush1.msra.mxu0 0.0
    %290 = vmatprep.subr.mxu0 0.0
    %291 = vmatpush1.msra.mxu0 0.0
    %292 = vmatprep.subr.mxu0 0.0
    %293 = vmatpush1.msra.mxu0 0.0
    %294 = vmatprep.subr.mxu0 0.0
    %295 = vmatpush1.msra.mxu0 0.0
    %296 = vmatprep.subr.mxu0 0.0
    %297 = vmatpush1.msra.mxu0 0.0
    %298 = vmatprep.subr.mxu0 0.0
    %299 = vmatpush1.msra.mxu0 0.0
    %300 = vmatprep.subr.mxu0 0.0
    %301 = vmatpush1.msra.mxu0 0.0
    %302 = vmatprep.subr.mxu0 0.0
    %303 = vmatpush1.msra.mxu0 0.0
    %304 = vmatprep.subr.mxu0 0.0
    %305 = vmatpush1.msra.mxu0 0.0
    %306 = vmatprep.subr.mxu0 0.0
    %307 = vmatpush1.msra.mxu0 0.0
    %308 = vmatprep.subr.mxu0 0.0
    %309 = vmatpush1.msra.mxu0 0.0
    %310 = vmatprep.subr.mxu0 0.0
    %311 = vmatpush1.msra.mxu0 0.0
    %312 = vmatprep.subr.mxu0 0.0
    %313 = vmatpush1.msra.mxu0 0.0
    %314 = vmatprep.subr.mxu0 0.0
    %315 = vmatpush1.msra.mxu0 0.0
    %316 = vmatprep.subr.mxu0 0.0
    %317 = vmatpush1.msra.mxu0 0.0
    %318 = vmatprep.subr.mxu0 0.0
    %319 = vmatpush1.msra.mxu0 0.0
    %320 = vmatprep.mubr.f32.mxu0 0.0
    %321 = vmatmul.mubr.f32.gmra.mrb[0].mxu0 %v254
    %v322 = vpop.f32.mrb[0].mxu0
    %v323 = vadd.f32 0.0, %v322
    %v324 = vpop.f32.mrb[0].mxu0
    %325 = vdwg.mxu0
    %vm326 = vcmp.gt.f32.partialorder %v323, 0.0
    %v327 = vmin.f32 %v323, 0.0
    %v328 = vmul.f32 %v327, 1.442695
    %v329 = vpow.pop %v328
    %v330 = vsub.f32 %v329, 1.0
    %v331 = vsel %vm326, %v323, %v330
    %s332 = scalar_lea.vmem %s2, 32
    %v333 = vld [vmem:[%s332] sm:$0xff]
    %v334 = vld [vmem:[%s332 + $0x8] sm:$0xff]
    %v335 = vld [vmem:[%s332 + $0x10] sm:$0xff]
    %v336 = vld [vmem:[%s332 + $0x18] sm:$0xff]
    %337 = vmatprep.subr.mxu0 0.0
    %338 = vmatpush1.msra.mxu0 %v333
    %339 = vmatprep.subr.mxu0 0.0
    %340 = vmatpush1.msra.mxu0 %v334
    %341 = vmatprep.subr.mxu0 0.0
    %342 = vmatpush1.msra.mxu0 %v335
    %343 = vmatprep.subr.mxu0 0.0
    %344 = vmatpush1.msra.mxu0 %v336
    %345 = vmatprep.subr.mxu0 0.0
    %346 = vmatpush1.msra.mxu0 0.0
    %347 = vmatprep.subr.mxu0 0.0
    %348 = vmatpush1.msra.mxu0 0.0
    %349 = vmatprep.subr.mxu0 0.0
    %350 = vmatpush1.msra.mxu0 0.0
    %351 = vmatprep.subr.mxu0 0.0
    %352 = vmatpush1.msra.mxu0 0.0
    %353 = vmatprep.subr.mxu0 0.0
    %354 = vmatpush1.msra.mxu0 0.0
    %355 = vmatprep.subr.mxu0 0.0
    %356 = vmatpush1.msra.mxu0 0.0
    %357 = vmatprep.subr.mxu0 0.0
    %358 = vmatpush1.msra.mxu0 0.0
    %359 = vmatprep.subr.mxu0 0.0
    %360 = vmatpush1.msra.mxu0 0.0
    %361 = vmatprep.subr.mxu0 0.0
    %362 = vmatpush1.msra.mxu0 0.0
    %363 = vmatprep.subr.mxu0 0.0
    %364 = vmatpush1.msra.mxu0 0.0
    %365 = vmatprep.subr.mxu0 0.0
    %366 = vmatpush1.msra.mxu0 0.0
    %367 = vmatprep.subr.mxu0 0.0
    %368 = vmatpush1.msra.mxu0 0.0
    %369 = vmatprep.subr.mxu0 0.0
    %370 = vmatpush1.msra.mxu0 0.0
    %371 = vmatprep.subr.mxu0 0.0
    %372 = vmatpush1.msra.mxu0 0.0
    %373 = vmatprep.subr.mxu0 0.0
    %374 = vmatpush1.msra.mxu0 0.0
    %375 = vmatprep.subr.mxu0 0.0
    %376 = vmatpush1.msra.mxu0 0.0
    %377 = vmatprep.subr.mxu0 0.0
    %378 = vmatpush1.msra.mxu0 0.0
    %379 = vmatprep.subr.mxu0 0.0
    %380 = vmatpush1.msra.mxu0 0.0
    %381 = vmatprep.subr.mxu0 0.0
    %382 = vmatpush1.msra.mxu0 0.0
    %383 = vmatprep.subr.mxu0 0.0
    %384 = vmatpush1.msra.mxu0 0.0
    %385 = vmatprep.subr.mxu0 0.0
    %386 = vmatpush1.msra.mxu0 0.0
    %387 = vmatprep.subr.mxu0 0.0
    %388 = vmatpush1.msra.mxu0 0.0
    %389 = vmatprep.subr.mxu0 0.0
    %390 = vmatpush1.msra.mxu0 0.0
    %391 = vmatprep.subr.mxu0 0.0
    %392 = vmatpush1.msra.mxu0 0.0
    %393 = vmatprep.subr.mxu0 0.0
    %394 = vmatpush1.msra.mxu0 0.0
    %395 = vmatprep.subr.mxu0 0.0
    %396 = vmatpush1.msra.mxu0 0.0
    %397 = vmatprep.subr.mxu0 0.0
    %398 = vmatpush1.msra.mxu0 0.0
    %399 = vmatprep.subr.mxu0 0.0
    %400 = vmatpush1.msra.mxu0 0.0
    %401 = vmatprep.mubr.f32.mxu0 0.0
    %402 = vmatmul.mubr.f32.gmra.mrb[0].mxu0 %v46
    %v403 = vpop.f32.mrb[0].mxu0
    %v404 = vadd.f32 0.0, %v403
    %v405 = vpop.f32.mrb[0].mxu0
    %406 = vdwg.mxu0
    %s407 = scalar_lea.vmem %s3, 8
    %v408 = vld [vmem:[%s407] sm:$0xff]
    %v410 = vsel %vm119, %v404, 0
    %412 = vmatprep.subr.mxu0 0.0
    %413 = vmatpush1.msra.mxu0 %v408
    %414 = vmatprep.subr.mxu0 0.0
    %415 = vmatpush1.msra.mxu0 0.0
    %416 = vmatprep.subr.mxu0 0.0
    %417 = vmatpush1.msra.mxu0 0.0
    %418 = vmatprep.subr.mxu0 0.0
    %419 = vmatpush1.msra.mxu0 0.0
    %420 = vmatprep.subr.mxu0 0.0
    %421 = vmatpush1.msra.mxu0 0.0
    %422 = vmatprep.subr.mxu0 0.0
    %423 = vmatpush1.msra.mxu0 0.0
    %424 = vmatprep.subr.mxu0 0.0
    %425 = vmatpush1.msra.mxu0 0.0
    %426 = vmatprep.subr.mxu0 0.0
    %427 = vmatpush1.msra.mxu0 0.0
    %428 = vmatprep.subr.mxu0 0.0
    %429 = vmatpush1.msra.mxu0 0.0
    %430 = vmatprep.subr.mxu0 0.0
    %431 = vmatpush1.msra.mxu0 0.0
    %432 = vmatprep.subr.mxu0 0.0
    %433 = vmatpush1.msra.mxu0 0.0
    %434 = vmatprep.subr.mxu0 0.0
    %435 = vmatpush1.msra.mxu0 0.0
    %436 = vmatprep.subr.mxu0 0.0
    %437 = vmatpush1.msra.mxu0 0.0
    %438 = vmatprep.subr.mxu0 0.0
    %439 = vmatpush1.msra.mxu0 0.0
    %440 = vmatprep.subr.mxu0 0.0
    %441 = vmatpush1.msra.mxu0 0.0
    %442 = vmatprep.subr.mxu0 0.0
    %443 = vmatpush1.msra.mxu0 0.0
    %444 = vmatprep.subr.mxu0 0.0
    %445 = vmatpush1.msra.mxu0 0.0
    %446 = vmatprep.subr.mxu0 0.0
    %447 = vmatpush1.msra.mxu0 0.0
    %448 = vmatprep.subr.mxu0 0.0
    %449 = vmatpush1.msra.mxu0 0.0
    %450 = vmatprep.subr.mxu0 0.0
    %451 = vmatpush1.msra.mxu0 0.0
    %452 = vmatprep.subr.mxu0 0.0
    %453 = vmatpush1.msra.mxu0 0.0
    %454 = vmatprep.subr.mxu0 0.0
    %455 = vmatpush1.msra.mxu0 0.0
    %456 = vmatprep.subr.mxu0 0.0
    %457 = vmatpush1.msra.mxu0 0.0
    %458 = vmatprep.subr.mxu0 0.0
    %459 = vmatpush1.msra.mxu0 0.0
    %460 = vmatprep.subr.mxu0 0.0
    %461 = vmatpush1.msra.mxu0 0.0
    %462 = vmatprep.subr.mxu0 0.0
    %463 = vmatpush1.msra.mxu0 0.0
    %464 = vmatprep.subr.mxu0 0.0
    %465 = vmatpush1.msra.mxu0 0.0
    %466 = vmatprep.subr.mxu0 0.0
    %467 = vmatpush1.msra.mxu0 0.0
    %468 = vmatprep.subr.mxu0 0.0
    %469 = vmatpush1.msra.mxu0 0.0
    %470 = vmatprep.subr.mxu0 0.0
    %471 = vmatpush1.msra.mxu0 0.0
    %472 = vmatprep.subr.mxu0 0.0
    %473 = vmatpush1.msra.mxu0 0.0
    %474 = vmatprep.subr.mxu0 0.0
    %475 = vmatpush1.msra.mxu0 0.0
    %476 = vmatprep.mubr.f32.mxu0 0.0
    %477 = vmatmul.mubr.f32.gmra.mrb[0].mxu0 %v410
    %v478 = vpop.f32.mrb[0].mxu0
    %v479 = vadd.f32 0.0, %v478
    %v480 = vpop.f32.mrb[0].mxu0
    %481 = vdwg.mxu0
    %483 = vrot.lane.b32.xlu0 %v479, 127
    %v484 = vpop.permute.xlu0 %483
    %486 = vxpose.xlu0.b32.start [1/16] %v484, 128
    %487 = vxpose.xlu0.b32.cont [2/16] 0.0, 128
    %488 = vxpose.xlu0.b32.cont [3/16] 0.0, 128
    %489 = vxpose.xlu0.b32.cont [4/16] 0.0, 128
    %490 = vxpose.xlu0.b32.cont [5/16] 0.0, 128
    %491 = vxpose.xlu0.b32.cont [6/16] 0.0, 128
    %492 = vxpose.xlu0.b32.cont [7/16] 0.0, 128
    %493 = vxpose.xlu0.b32.cont [8/16] 0.0, 128
    %494 = vxpose.xlu0.b32.cont [9/16] 0.0, 128
    %495 = vxpose.xlu0.b32.cont [10/16] 0.0, 128
    %496 = vxpose.xlu0.b32.cont [11/16] 0.0, 128
    %497 = vxpose.xlu0.b32.cont [12/16] 0.0, 128
    %498 = vxpose.xlu0.b32.cont [13/16] 0.0, 128
    %499 = vxpose.xlu0.b32.cont [14/16] 0.0, 128
    %500 = vxpose.xlu0.b32.cont [15/16] 0.0, 128
    %501 = vxpose.xlu0.b32.end [16/16] 0.0, 128
    %v502 = vpop.trf.xlu0
    %v503 = vpop.trf.xlu0
    %v504 = vpop.trf.xlu0
    %v505 = vpop.trf.xlu0
    %v506 = vpop.trf.xlu0
    %v507 = vpop.trf.xlu0
    %v508 = vpop.trf.xlu0
    %v509 = vpop.trf.xlu0
    %v510 = vpop.trf.xlu0
    %v511 = vpop.trf.xlu0
    %v512 = vpop.trf.xlu0
    %v513 = vpop.trf.xlu0
    %v514 = vpop.trf.xlu0
    %v515 = vpop.trf.xlu0
    %v516 = vpop.trf.xlu0
    %v517 = vpop.trf.xlu0
    %518 = vset.pattern.permute.xlu0 0
    %519 = vperm.xlu0 %518, %v479
    %v520 = vpop.permute.xlu0 %519
    %v522 = vlaneseq
    %v523 = vshrl.u32 %v522, 7
    %v524 = vsub.s32 0, %v523
    %v525 = vrot.slane %v502, %v524
    %v526 = vadd.f32 %v520, %v525
    %vm527 = vcmp.gt.f32.partialorder %v526, 0.0
    %v528 = vmul.f32 %v526, 0.2
    %v529 = vsel %vm527, %v526, %v528
    %v530 = vadd.f32 %v529, %v38
    %v531 = vsel %vm119, %v530, -inf
    %532 = vmax.xlane.f32.xlu0 %v531
    %v533 = vpop.xlane.xlu0 %532
    %v534 = vsub.f32 %v530, %v533
    %v535 = vmul.f32 %v534, 1.442695
    %v536 = vpow.pop %v535
    %v537 = vsel %vm119, %v536, 0.0
    %538 = vadd.xlane.f32.xlu0 %v537
    %v539 = vpop.xlane.xlu0 %538
    %v540 = vrcp.pop %v539
    %v541 = vmul.f32 %v536, %v540
    %v543 = vsel %vm119, %v541, 0
    %545 = vmatprep.subr.mxu0 0.0
    %546 = vmatpush1.msra.mxu0 %v404
    %547 = vmatprep.subr.mxu0 0.0
    %548 = vmatpush1.msra.mxu0 0.0
    %549 = vmatprep.subr.mxu0 0.0
    %550 = vmatpush1.msra.mxu0 0.0
    %551 = vmatprep.subr.mxu0 0.0
    %552 = vmatpush1.msra.mxu0 0.0
    %553 = vmatprep.subr.mxu0 0.0
    %554 = vmatpush1.msra.mxu0 0.0
    %555 = vmatprep.subr.mxu0 0.0
    %556 = vmatpush1.msra.mxu0 0.0
    %557 = vmatprep.subr.mxu0 0.0
    %558 = vmatpush1.msra.mxu0 0.0
    %559 = vmatprep.subr.mxu0 0.0
    %560 = vmatpush1.msra.mxu0 0.0
    %561 = vmatprep.subr.mxu0 0.0
    %562 = vmatpush1.msra.mxu0 0.0
    %563 = vmatprep.subr.mxu0 0.0
    %564 = vmatpush1.msra.mxu0 0.0
    %565 = vmatprep.subr.mxu0 0.0
    %566 = vmatpush1.msra.mxu0 0.0
    %567 = vmatprep.subr.mxu0 0.0
    %568 = vmatpush1.msra.mxu0 0.0
    %569 = vmatprep.subr.mxu0 0.0
    %570 = vmatpush1.msra.mxu0 0.0
    %571 = vmatprep.subr.mxu0 0.0
    %572 = vmatpush1.msra.mxu0 0.0
    %573 = vmatprep.subr.mxu0 0.0
    %574 = vmatpush1.msra.mxu0 0.0
    %575 = vmatprep.subr.mxu0 0.0
    %576 = vmatpush1.msra.mxu0 0.0
    %577 = vmatprep.subr.mxu0 0.0
    %578 = vmatpush1.msra.mxu0 0.0
    %579 = vmatprep.subr.mxu0 0.0
    %580 = vmatpush1.msra.mxu0 0.0
    %581 = vmatprep.subr.mxu0 0.0
    %582 = vmatpush1.msra.mxu0 0.0
    %583 = vmatprep.subr.mxu0 0.0
    %584 = vmatpush1.msra.mxu0 0.0
    %585 = vmatprep.subr.mxu0 0.0
    %586 = vmatpush1.msra.mxu0 0.0
    %587 = vmatprep.subr.mxu0 0.0
    %588 = vmatpush1.msra.mxu0 0.0
    %589 = vmatprep.subr.mxu0 0.0
    %590 = vmatpush1.msra.mxu0 0.0
    %591 = vmatprep.subr.mxu0 0.0
    %592 = vmatpush1.msra.mxu0 0.0
    %593 = vmatprep.subr.mxu0 0.0
    %594 = vmatpush1.msra.mxu0 0.0
    %595 = vmatprep.subr.mxu0 0.0
    %596 = vmatpush1.msra.mxu0 0.0
    %597 = vmatprep.subr.mxu0 0.0
    %598 = vmatpush1.msra.mxu0 0.0
    %599 = vmatprep.subr.mxu0 0.0
    %600 = vmatpush1.msra.mxu0 0.0
    %601 = vmatprep.subr.mxu0 0.0
    %602 = vmatpush1.msra.mxu0 0.0
    %603 = vmatprep.subr.mxu0 0.0
    %604 = vmatpush1.msra.mxu0 0.0
    %605 = vmatprep.subr.mxu0 0.0
    %606 = vmatpush1.msra.mxu0 0.0
    %607 = vmatprep.subr.mxu0 0.0
    %608 = vmatpush1.msra.mxu0 0.0
    %609 = vmatprep.mubr.f32.mxu0 0.0
    %610 = vmatmul.mubr.f32.gmra.mrb[0].mxu0 %v543
    %v611 = vpop.f32.mrb[0].mxu0
    %v612 = vadd.f32 0.0, %v611
    %v613 = vpop.f32.mrb[0].mxu0
    %614 = vdwg.mxu0
    %vm615 = vcmp.gt.f32.partialorder %v612, 0.0
    %v616 = vmin.f32 %v612, 0.0
    %v617 = vmul.f32 %v616, 1.442695
    %v618 = vpow.pop %v617
    %v619 = vsub.f32 %v618, 1.0
    %v620 = vsel %vm615, %v612, %v619
    %s621 = scalar_lea.vmem %s2, 64
    %v622 = vld [vmem:[%s621] sm:$0xff]
    %v623 = vld [vmem:[%s621 + $0x8] sm:$0xff]
    %v624 = vld [vmem:[%s621 + $0x10] sm:$0xff]
    %v625 = vld [vmem:[%s621 + $0x18] sm:$0xff]
    %626 = vmatprep.subr.mxu0 0.0
    %627 = vmatpush1.msra.mxu0 %v622
    %628 = vmatprep.subr.mxu0 0.0
    %629 = vmatpush1.msra.mxu0 %v623
    %630 = vmatprep.subr.mxu0 0.0
    %631 = vmatpush1.msra.mxu0 %v624
    %632 = vmatprep.subr.mxu0 0.0
    %633 = vmatpush1.msra.mxu0 %v625
    %634 = vmatprep.subr.mxu0 0.0
    %635 = vmatpush1.msra.mxu0 0.0
    %636 = vmatprep.subr.mxu0 0.0
    %637 = vmatpush1.msra.mxu0 0.0
    %638 = vmatprep.subr.mxu0 0.0
    %639 = vmatpush1.msra.mxu0 0.0
    %640 = vmatprep.subr.mxu0 0.0
    %641 = vmatpush1.msra.mxu0 0.0
    %642 = vmatprep.subr.mxu0 0.0
    %643 = vmatpush1.msra.mxu0 0.0
    %644 = vmatprep.subr.mxu0 0.0
    %645 = vmatpush1.msra.mxu0 0.0
    %646 = vmatprep.subr.mxu0 0.0
    %647 = vmatpush1.msra.mxu0 0.0
    %648 = vmatprep.subr.mxu0 0.0
    %649 = vmatpush1.msra.mxu0 0.0
    %650 = vmatprep.subr.mxu0 0.0
    %651 = vmatpush1.msra.mxu0 0.0
    %652 = vmatprep.subr.mxu0 0.0
    %653 = vmatpush1.msra.mxu0 0.0
    %654 = vmatprep.subr.mxu0 0.0
    %655 = vmatpush1.msra.mxu0 0.0
    %656 = vmatprep.subr.mxu0 0.0
    %657 = vmatpush1.msra.mxu0 0.0
    %658 = vmatprep.subr.mxu0 0.0
    %659 = vmatpush1.msra.mxu0 0.0
    %660 = vmatprep.subr.mxu0 0.0
    %661 = vmatpush1.msra.mxu0 0.0
    %662 = vmatprep.subr.mxu0 0.0
    %663 = vmatpush1.msra.mxu0 0.0
    %664 = vmatprep.subr.mxu0 0.0
    %665 = vmatpush1.msra.mxu0 0.0
    %666 = vmatprep.subr.mxu0 0.0
    %667 = vmatpush1.msra.mxu0 0.0
    %668 = vmatprep.subr.mxu0 0.0
    %669 = vmatpush1.msra.mxu0 0.0
    %670 = vmatprep.subr.mxu0 0.0
    %671 = vmatpush1.msra.mxu0 0.0
    %672 = vmatprep.subr.mxu0 0.0
    %673 = vmatpush1.msra.mxu0 0.0
    %674 = vmatprep.subr.mxu0 0.0
    %675 = vmatpush1.msra.mxu0 0.0
    %676 = vmatprep.subr.mxu0 0.0
    %677 = vmatpush1.msra.mxu0 0.0
    %678 = vmatprep.subr.mxu0 0.0
    %679 = vmatpush1.msra.mxu0 0.0
    %680 = vmatprep.subr.mxu0 0.0
    %681 = vmatpush1.msra.mxu0 0.0
    %682 = vmatprep.subr.mxu0 0.0
    %683 = vmatpush1.msra.mxu0 0.0
    %684 = vmatprep.subr.mxu0 0.0
    %685 = vmatpush1.msra.mxu0 0.0
    %686 = vmatprep.subr.mxu0 0.0
    %687 = vmatpush1.msra.mxu0 0.0
    %688 = vmatprep.subr.mxu0 0.0
    %689 = vmatpush1.msra.mxu0 0.0
    %690 = vmatprep.mubr.f32.mxu0 0.0
    %691 = vmatmul.mubr.f32.gmra.mrb[0].mxu0 %v46
    %v692 = vpop.f32.mrb[0].mxu0
    %v693 = vadd.f32 0.0, %v692
    %v694 = vpop.f32.mrb[0].mxu0
    %695 = vdwg.mxu0
    %s696 = scalar_lea.vmem %s3, 16
    %v697 = vld [vmem:[%s696] sm:$0xff]
    %v699 = vsel %vm119, %v693, 0
    %701 = vmatprep.subr.mxu0 0.0
    %702 = vmatpush1.msra.mxu0 %v697
    %703 = vmatprep.subr.mxu0 0.0
    %704 = vmatpush1.msra.mxu0 0.0
    %705 = vmatprep.subr.mxu0 0.0
    %706 = vmatpush1.msra.mxu0 0.0
    %707 = vmatprep.subr.mxu0 0.0
    %708 = vmatpush1.msra.mxu0 0.0
    %709 = vmatprep.subr.mxu0 0.0
    %710 = vmatpush1.msra.mxu0 0.0
    %711 = vmatprep.subr.mxu0 0.0
    %712 = vmatpush1.msra.mxu0 0.0
    %713 = vmatprep.subr.mxu0 0.0
    %714 = vmatpush1.msra.mxu0 0.0
    %715 = vmatprep.subr.mxu0 0.0
    %716 = vmatpush1.msra.mxu0 0.0
    %717 = vmatprep.subr.mxu0 0.0
    %718 = vmatpush1.msra.mxu0 0.0
    %719 = vmatprep.subr.mxu0 0.0
    %720 = vmatpush1.msra.mxu0 0.0
    %721 = vmatprep.subr.mxu0 0.0
    %722 = vmatpush1.msra.mxu0 0.0
    %723 = vmatprep.subr.mxu0 0.0
    %724 = vmatpush1.msra.mxu0 0.0
    %725 = vmatprep.subr.mxu0 0.0
    %726 = vmatpush1.msra.mxu0 0.0
    %727 = vmatprep.subr.mxu0 0.0
    %728 = vmatpush1.msra.mxu0 0.0
    %729 = vmatprep.subr.mxu0 0.0
    %730 = vmatpush1.msra.mxu0 0.0
    %731 = vmatprep.subr.mxu0 0.0
    %732 = vmatpush1.msra.mxu0 0.0
    %733 = vmatprep.subr.mxu0 0.0
    %734 = vmatpush1.msra.mxu0 0.0
    %735 = vmatprep.subr.mxu0 0.0
    %736 = vmatpush1.msra.mxu0 0.0
    %737 = vmatprep.subr.mxu0 0.0
    %738 = vmatpush1.msra.mxu0 0.0
    %739 = vmatprep.subr.mxu0 0.0
    %740 = vmatpush1.msra.mxu0 0.0
    %741 = vmatprep.subr.mxu0 0.0
    %742 = vmatpush1.msra.mxu0 0.0
    %743 = vmatprep.subr.mxu0 0.0
    %744 = vmatpush1.msra.mxu0 0.0
    %745 = vmatprep.subr.mxu0 0.0
    %746 = vmatpush1.msra.mxu0 0.0
    %747 = vmatprep.subr.mxu0 0.0
    %748 = vmatpush1.msra.mxu0 0.0
    %749 = vmatprep.subr.mxu0 0.0
    %750 = vmatpush1.msra.mxu0 0.0
    %751 = vmatprep.subr.mxu0 0.0
    %752 = vmatpush1.msra.mxu0 0.0
    %753 = vmatprep.subr.mxu0 0.0
    %754 = vmatpush1.msra.mxu0 0.0
    %755 = vmatprep.subr.mxu0 0.0
    %756 = vmatpush1.msra.mxu0 0.0
    %757 = vmatprep.subr.mxu0 0.0
    %758 = vmatpush1.msra.mxu0 0.0
    %759 = vmatprep.subr.mxu0 0.0
    %760 = vmatpush1.msra.mxu0 0.0
    %761 = vmatprep.subr.mxu0 0.0
    %762 = vmatpush1.msra.mxu0 0.0
    %763 = vmatprep.subr.mxu0 0.0
    %764 = vmatpush1.msra.mxu0 0.0
    %765 = vmatprep.mubr.f32.mxu0 0.0
    %766 = vmatmul.mubr.f32.gmra.mrb[0].mxu0 %v699
    %v767 = vpop.f32.mrb[0].mxu0
    %v768 = vadd.f32 0.0, %v767
    %v769 = vpop.f32.mrb[0].mxu0
    %770 = vdwg.mxu0
    %772 = vrot.lane.b32.xlu0 %v768, 127
    %v773 = vpop.permute.xlu0 %772
    %775 = vxpose.xlu0.b32.start [1/16] %v773, 128
    %776 = vxpose.xlu0.b32.cont [2/16] 0.0, 128
    %777 = vxpose.xlu0.b32.cont [3/16] 0.0, 128
    %778 = vxpose.xlu0.b32.cont [4/16] 0.0, 128
    %779 = vxpose.xlu0.b32.cont [5/16] 0.0, 128
    %780 = vxpose.xlu0.b32.cont [6/16] 0.0, 128
    %781 = vxpose.xlu0.b32.cont [7/16] 0.0, 128
    %782 = vxpose.xlu0.b32.cont [8/16] 0.0, 128
    %783 = vxpose.xlu0.b32.cont [9/16] 0.0, 128
    %784 = vxpose.xlu0.b32.cont [10/16] 0.0, 128
    %785 = vxpose.xlu0.b32.cont [11/16] 0.0, 128
    %786 = vxpose.xlu0.b32.cont [12/16] 0.0, 128
    %787 = vxpose.xlu0.b32.cont [13/16] 0.0, 128
    %788 = vxpose.xlu0.b32.cont [14/16] 0.0, 128
    %789 = vxpose.xlu0.b32.cont [15/16] 0.0, 128
    %790 = vxpose.xlu0.b32.end [16/16] 0.0, 128
    %v791 = vpop.trf.xlu0
    %v792 = vpop.trf.xlu0
    %v793 = vpop.trf.xlu0
    %v794 = vpop.trf.xlu0
    %v795 = vpop.trf.xlu0
    %v796 = vpop.trf.xlu0
    %v797 = vpop.trf.xlu0
    %v798 = vpop.trf.xlu0
    %v799 = vpop.trf.xlu0
    %v800 = vpop.trf.xlu0
    %v801 = vpop.trf.xlu0
    %v802 = vpop.trf.xlu0
    %v803 = vpop.trf.xlu0
    %v804 = vpop.trf.xlu0
    %v805 = vpop.trf.xlu0
    %v806 = vpop.trf.xlu0
    %807 = vset.pattern.permute.xlu0 0
    %808 = vperm.xlu0 %807, %v768
    %v809 = vpop.permute.xlu0 %808
    %v811 = vlaneseq
    %v812 = vshrl.u32 %v811, 7
    %v813 = vsub.s32 0, %v812
    %v814 = vrot.slane %v791, %v813
    %v815 = vadd.f32 %v809, %v814
    %vm816 = vcmp.gt.f32.partialorder %v815, 0.0
    %v817 = vmul.f32 %v815, 0.2
    %v818 = vsel %vm816, %v815, %v817
    %v819 = vadd.f32 %v818, %v38
    %v820 = vsel %vm119, %v819, -inf
    %821 = vmax.xlane.f32.xlu0 %v820
    %v822 = vpop.xlane.xlu0 %821
    %v823 = vsub.f32 %v819, %v822
    %v824 = vmul.f32 %v823, 1.442695
    %v825 = vpow.pop %v824
    %v826 = vsel %vm119, %v825, 0.0
    %827 = vadd.xlane.f32.xlu0 %v826
    %v828 = vpop.xlane.xlu0 %827
    %v829 = vrcp.pop %v828
    %v830 = vmul.f32 %v825, %v829
    %v832 = vsel %vm119, %v830, 0
    %834 = vmatprep.subr.mxu0 0.0
    %835 = vmatpush1.msra.mxu0 %v693
    %836 = vmatprep.subr.mxu0 0.0
    %837 = vmatpush1.msra.mxu0 0.0
    %838 = vmatprep.subr.mxu0 0.0
    %839 = vmatpush1.msra.mxu0 0.0
    %840 = vmatprep.subr.mxu0 0.0
    %841 = vmatpush1.msra.mxu0 0.0
    %842 = vmatprep.subr.mxu0 0.0
    %843 = vmatpush1.msra.mxu0 0.0
    %844 = vmatprep.subr.mxu0 0.0
    %845 = vmatpush1.msra.mxu0 0.0
    %846 = vmatprep.subr.mxu0 0.0
    %847 = vmatpush1.msra.mxu0 0.0
    %848 = vmatprep.subr.mxu0 0.0
    %849 = vmatpush1.msra.mxu0 0.0
    %850 = vmatprep.subr.mxu0 0.0
    %851 = vmatpush1.msra.mxu0 0.0
    %852 = vmatprep.subr.mxu0 0.0
    %853 = vmatpush1.msra.mxu0 0.0
    %854 = vmatprep.subr.mxu0 0.0
    %855 = vmatpush1.msra.mxu0 0.0
    %856 = vmatprep.subr.mxu0 0.0
    %857 = vmatpush1.msra.mxu0 0.0
    %858 = vmatprep.subr.mxu0 0.0
    %859 = vmatpush1.msra.mxu0 0.0
    %860 = vmatprep.subr.mxu0 0.0
    %861 = vmatpush1.msra.mxu0 0.0
    %862 = vmatprep.subr.mxu0 0.0
    %863 = vmatpush1.msra.mxu0 0.0
    %864 = vmatprep.subr.mxu0 0.0
    %865 = vmatpush1.msra.mxu0 0.0
    %866 = vmatprep.subr.mxu0 0.0
    %867 = vmatpush1.msra.mxu0 0.0
    %868 = vmatprep.subr.mxu0 0.0
    %869 = vmatpush1.msra.mxu0 0.0
    %870 = vmatprep.subr.mxu0 0.0
    %871 = vmatpush1.msra.mxu0 0.0
    %872 = vmatprep.subr.mxu0 0.0
    %873 = vmatpush1.msra.mxu0 0.0
    %874 = vmatprep.subr.mxu0 0.0
    %875 = vmatpush1.msra.mxu0 0.0
    %876 = vmatprep.subr.mxu0 0.0
    %877 = vmatpush1.msra.mxu0 0.0
    %878 = vmatprep.subr.mxu0 0.0
    %879 = vmatpush1.msra.mxu0 0.0
    %880 = vmatprep.subr.mxu0 0.0
    %881 = vmatpush1.msra.mxu0 0.0
    %882 = vmatprep.subr.mxu0 0.0
    %883 = vmatpush1.msra.mxu0 0.0
    %884 = vmatprep.subr.mxu0 0.0
    %885 = vmatpush1.msra.mxu0 0.0
    %886 = vmatprep.subr.mxu0 0.0
    %887 = vmatpush1.msra.mxu0 0.0
    %888 = vmatprep.subr.mxu0 0.0
    %889 = vmatpush1.msra.mxu0 0.0
    %890 = vmatprep.subr.mxu0 0.0
    %891 = vmatpush1.msra.mxu0 0.0
    %892 = vmatprep.subr.mxu0 0.0
    %893 = vmatpush1.msra.mxu0 0.0
    %894 = vmatprep.subr.mxu0 0.0
    %895 = vmatpush1.msra.mxu0 0.0
    %896 = vmatprep.subr.mxu0 0.0
    %897 = vmatpush1.msra.mxu0 0.0
    %898 = vmatprep.mubr.f32.mxu0 0.0
    %899 = vmatmul.mubr.f32.gmra.mrb[0].mxu0 %v832
    %v900 = vpop.f32.mrb[0].mxu0
    %v901 = vadd.f32 0.0, %v900
    %v902 = vpop.f32.mrb[0].mxu0
    %903 = vdwg.mxu0
    %vm904 = vcmp.gt.f32.partialorder %v901, 0.0
    %v905 = vmin.f32 %v901, 0.0
    %v906 = vmul.f32 %v905, 1.442695
    %v907 = vpow.pop %v906
    %v908 = vsub.f32 %v907, 1.0
    %v909 = vsel %vm904, %v901, %v908
    %s910 = scalar_lea.vmem %s2, 96
    %v911 = vld [vmem:[%s910] sm:$0xff]
    %v912 = vld [vmem:[%s910 + $0x8] sm:$0xff]
    %v913 = vld [vmem:[%s910 + $0x10] sm:$0xff]
    %v914 = vld [vmem:[%s910 + $0x18] sm:$0xff]
    %915 = vmatprep.subr.mxu0 0.0
    %916 = vmatpush1.msra.mxu0 %v911
    %917 = vmatprep.subr.mxu0 0.0
    %918 = vmatpush1.msra.mxu0 %v912
    %919 = vmatprep.subr.mxu0 0.0
    %920 = vmatpush1.msra.mxu0 %v913
    %921 = vmatprep.subr.mxu0 0.0
    %922 = vmatpush1.msra.mxu0 %v914
    %923 = vmatprep.subr.mxu0 0.0
    %924 = vmatpush1.msra.mxu0 0.0
    %925 = vmatprep.subr.mxu0 0.0
    %926 = vmatpush1.msra.mxu0 0.0
    %927 = vmatprep.subr.mxu0 0.0
    %928 = vmatpush1.msra.mxu0 0.0
    %929 = vmatprep.subr.mxu0 0.0
    %930 = vmatpush1.msra.mxu0 0.0
    %931 = vmatprep.subr.mxu0 0.0
    %932 = vmatpush1.msra.mxu0 0.0
    %933 = vmatprep.subr.mxu0 0.0
    %934 = vmatpush1.msra.mxu0 0.0
    %935 = vmatprep.subr.mxu0 0.0
    %936 = vmatpush1.msra.mxu0 0.0
    %937 = vmatprep.subr.mxu0 0.0
    %938 = vmatpush1.msra.mxu0 0.0
    %939 = vmatprep.subr.mxu0 0.0
    %940 = vmatpush1.msra.mxu0 0.0
    %941 = vmatprep.subr.mxu0 0.0
    %942 = vmatpush1.msra.mxu0 0.0
    %943 = vmatprep.subr.mxu0 0.0
    %944 = vmatpush1.msra.mxu0 0.0
    %945 = vmatprep.subr.mxu0 0.0
    %946 = vmatpush1.msra.mxu0 0.0
    %947 = vmatprep.subr.mxu0 0.0
    %948 = vmatpush1.msra.mxu0 0.0
    %949 = vmatprep.subr.mxu0 0.0
    %950 = vmatpush1.msra.mxu0 0.0
    %951 = vmatprep.subr.mxu0 0.0
    %952 = vmatpush1.msra.mxu0 0.0
    %953 = vmatprep.subr.mxu0 0.0
    %954 = vmatpush1.msra.mxu0 0.0
    %955 = vmatprep.subr.mxu0 0.0
    %956 = vmatpush1.msra.mxu0 0.0
    %957 = vmatprep.subr.mxu0 0.0
    %958 = vmatpush1.msra.mxu0 0.0
    %959 = vmatprep.subr.mxu0 0.0
    %960 = vmatpush1.msra.mxu0 0.0
    %961 = vmatprep.subr.mxu0 0.0
    %962 = vmatpush1.msra.mxu0 0.0
    %963 = vmatprep.subr.mxu0 0.0
    %964 = vmatpush1.msra.mxu0 0.0
    %965 = vmatprep.subr.mxu0 0.0
    %966 = vmatpush1.msra.mxu0 0.0
    %967 = vmatprep.subr.mxu0 0.0
    %968 = vmatpush1.msra.mxu0 0.0
    %969 = vmatprep.subr.mxu0 0.0
    %970 = vmatpush1.msra.mxu0 0.0
    %971 = vmatprep.subr.mxu0 0.0
    %972 = vmatpush1.msra.mxu0 0.0
    %973 = vmatprep.subr.mxu0 0.0
    %974 = vmatpush1.msra.mxu0 0.0
    %975 = vmatprep.subr.mxu0 0.0
    %976 = vmatpush1.msra.mxu0 0.0
    %977 = vmatprep.subr.mxu0 0.0
    %978 = vmatpush1.msra.mxu0 0.0
    %979 = vmatprep.mubr.f32.mxu0 0.0
    %980 = vmatmul.mubr.f32.gmra.mrb[0].mxu0 %v46
    %v981 = vpop.f32.mrb[0].mxu0
    %v982 = vadd.f32 0.0, %v981
    %v983 = vpop.f32.mrb[0].mxu0
    %984 = vdwg.mxu0
    %s985 = scalar_lea.vmem %s3, 24
    %v986 = vld [vmem:[%s985] sm:$0xff]
    %v988 = vsel %vm119, %v982, 0
    %990 = vmatprep.subr.mxu0 0.0
    %991 = vmatpush1.msra.mxu0 %v986
    %992 = vmatprep.subr.mxu0 0.0
    %993 = vmatpush1.msra.mxu0 0.0
    %994 = vmatprep.subr.mxu0 0.0
    %995 = vmatpush1.msra.mxu0 0.0
    %996 = vmatprep.subr.mxu0 0.0
    %997 = vmatpush1.msra.mxu0 0.0
    %998 = vmatprep.subr.mxu0 0.0
    %999 = vmatpush1.msra.mxu0 0.0
    %1000 = vmatprep.subr.mxu0 0.0
    %1001 = vmatpush1.msra.mxu0 0.0
    %1002 = vmatprep.subr.mxu0 0.0
    %1003 = vmatpush1.msra.mxu0 0.0
    %1004 = vmatprep.subr.mxu0 0.0
    %1005 = vmatpush1.msra.mxu0 0.0
    %1006 = vmatprep.subr.mxu0 0.0
    %1007 = vmatpush1.msra.mxu0 0.0
    %1008 = vmatprep.subr.mxu0 0.0
    %1009 = vmatpush1.msra.mxu0 0.0
    %1010 = vmatprep.subr.mxu0 0.0
    %1011 = vmatpush1.msra.mxu0 0.0
    %1012 = vmatprep.subr.mxu0 0.0
    %1013 = vmatpush1.msra.mxu0 0.0
    %1014 = vmatprep.subr.mxu0 0.0
    %1015 = vmatpush1.msra.mxu0 0.0
    %1016 = vmatprep.subr.mxu0 0.0
    %1017 = vmatpush1.msra.mxu0 0.0
    %1018 = vmatprep.subr.mxu0 0.0
    %1019 = vmatpush1.msra.mxu0 0.0
    %1020 = vmatprep.subr.mxu0 0.0
    %1021 = vmatpush1.msra.mxu0 0.0
    %1022 = vmatprep.subr.mxu0 0.0
    %1023 = vmatpush1.msra.mxu0 0.0
    %1024 = vmatprep.subr.mxu0 0.0
    %1025 = vmatpush1.msra.mxu0 0.0
    %1026 = vmatprep.subr.mxu0 0.0
    %1027 = vmatpush1.msra.mxu0 0.0
    %1028 = vmatprep.subr.mxu0 0.0
    %1029 = vmatpush1.msra.mxu0 0.0
    %1030 = vmatprep.subr.mxu0 0.0
    %1031 = vmatpush1.msra.mxu0 0.0
    %1032 = vmatprep.subr.mxu0 0.0
    %1033 = vmatpush1.msra.mxu0 0.0
    %1034 = vmatprep.subr.mxu0 0.0
    %1035 = vmatpush1.msra.mxu0 0.0
    %1036 = vmatprep.subr.mxu0 0.0
    %1037 = vmatpush1.msra.mxu0 0.0
    %1038 = vmatprep.subr.mxu0 0.0
    %1039 = vmatpush1.msra.mxu0 0.0
    %1040 = vmatprep.subr.mxu0 0.0
    %1041 = vmatpush1.msra.mxu0 0.0
    %1042 = vmatprep.subr.mxu0 0.0
    %1043 = vmatpush1.msra.mxu0 0.0
    %1044 = vmatprep.subr.mxu0 0.0
    %1045 = vmatpush1.msra.mxu0 0.0
    %1046 = vmatprep.subr.mxu0 0.0
    %1047 = vmatpush1.msra.mxu0 0.0
    %1048 = vmatprep.subr.mxu0 0.0
    %1049 = vmatpush1.msra.mxu0 0.0
    %1050 = vmatprep.subr.mxu0 0.0
    %1051 = vmatpush1.msra.mxu0 0.0
    %1052 = vmatprep.subr.mxu0 0.0
    %1053 = vmatpush1.msra.mxu0 0.0
    %1054 = vmatprep.mubr.f32.mxu0 0.0
    %1055 = vmatmul.mubr.f32.gmra.mrb[0].mxu0 %v988
    %v1056 = vpop.f32.mrb[0].mxu0
    %v1057 = vadd.f32 0.0, %v1056
    %v1058 = vpop.f32.mrb[0].mxu0
    %1059 = vdwg.mxu0
    %1061 = vrot.lane.b32.xlu0 %v1057, 127
    %v1062 = vpop.permute.xlu0 %1061
    %1064 = vxpose.xlu0.b32.start [1/16] %v1062, 128
    %1065 = vxpose.xlu0.b32.cont [2/16] 0.0, 128
    %1066 = vxpose.xlu0.b32.cont [3/16] 0.0, 128
    %1067 = vxpose.xlu0.b32.cont [4/16] 0.0, 128
    %1068 = vxpose.xlu0.b32.cont [5/16] 0.0, 128
    %1069 = vxpose.xlu0.b32.cont [6/16] 0.0, 128
    %1070 = vxpose.xlu0.b32.cont [7/16] 0.0, 128
    %1071 = vxpose.xlu0.b32.cont [8/16] 0.0, 128
    %1072 = vxpose.xlu0.b32.cont [9/16] 0.0, 128
    %1073 = vxpose.xlu0.b32.cont [10/16] 0.0, 128
    %1074 = vxpose.xlu0.b32.cont [11/16] 0.0, 128
    %1075 = vxpose.xlu0.b32.cont [12/16] 0.0, 128
    %1076 = vxpose.xlu0.b32.cont [13/16] 0.0, 128
    %1077 = vxpose.xlu0.b32.cont [14/16] 0.0, 128
    %1078 = vxpose.xlu0.b32.cont [15/16] 0.0, 128
    %1079 = vxpose.xlu0.b32.end [16/16] 0.0, 128
    %v1080 = vpop.trf.xlu0
    %v1081 = vpop.trf.xlu0
    %v1082 = vpop.trf.xlu0
    %v1083 = vpop.trf.xlu0
    %v1084 = vpop.trf.xlu0
    %v1085 = vpop.trf.xlu0
    %v1086 = vpop.trf.xlu0
    %v1087 = vpop.trf.xlu0
    %v1088 = vpop.trf.xlu0
    %v1089 = vpop.trf.xlu0
    %v1090 = vpop.trf.xlu0
    %v1091 = vpop.trf.xlu0
    %v1092 = vpop.trf.xlu0
    %v1093 = vpop.trf.xlu0
    %v1094 = vpop.trf.xlu0
    %v1095 = vpop.trf.xlu0
    %1096 = vset.pattern.permute.xlu0 0
    %1097 = vperm.xlu0 %1096, %v1057
    %v1098 = vpop.permute.xlu0 %1097
    %v1100 = vlaneseq
    %v1101 = vshrl.u32 %v1100, 7
    %v1102 = vsub.s32 0, %v1101
    %v1103 = vrot.slane %v1080, %v1102
    %v1104 = vadd.f32 %v1098, %v1103
    %vm1105 = vcmp.gt.f32.partialorder %v1104, 0.0
    %v1106 = vmul.f32 %v1104, 0.2
    %v1107 = vsel %vm1105, %v1104, %v1106
    %v1108 = vadd.f32 %v1107, %v38
    %v1109 = vsel %vm119, %v1108, -inf
    %1110 = vmax.xlane.f32.xlu0 %v1109
    %v1111 = vpop.xlane.xlu0 %1110
    %v1112 = vsub.f32 %v1108, %v1111
    %v1113 = vmul.f32 %v1112, 1.442695
    %v1114 = vpow.pop %v1113
    %v1115 = vsel %vm119, %v1114, 0.0
    %1116 = vadd.xlane.f32.xlu0 %v1115
    %v1117 = vpop.xlane.xlu0 %1116
    %v1118 = vrcp.pop %v1117
    %v1119 = vmul.f32 %v1114, %v1118
    %v1121 = vsel %vm119, %v1119, 0
    %1123 = vmatprep.subr.mxu0 0.0
    %1124 = vmatpush1.msra.mxu0 %v982
    %1125 = vmatprep.subr.mxu0 0.0
    %1126 = vmatpush1.msra.mxu0 0.0
    %1127 = vmatprep.subr.mxu0 0.0
    %1128 = vmatpush1.msra.mxu0 0.0
    %1129 = vmatprep.subr.mxu0 0.0
    %1130 = vmatpush1.msra.mxu0 0.0
    %1131 = vmatprep.subr.mxu0 0.0
    %1132 = vmatpush1.msra.mxu0 0.0
    %1133 = vmatprep.subr.mxu0 0.0
    %1134 = vmatpush1.msra.mxu0 0.0
    %1135 = vmatprep.subr.mxu0 0.0
    %1136 = vmatpush1.msra.mxu0 0.0
    %1137 = vmatprep.subr.mxu0 0.0
    %1138 = vmatpush1.msra.mxu0 0.0
    %1139 = vmatprep.subr.mxu0 0.0
    %1140 = vmatpush1.msra.mxu0 0.0
    %1141 = vmatprep.subr.mxu0 0.0
    %1142 = vmatpush1.msra.mxu0 0.0
    %1143 = vmatprep.subr.mxu0 0.0
    %1144 = vmatpush1.msra.mxu0 0.0
    %1145 = vmatprep.subr.mxu0 0.0
    %1146 = vmatpush1.msra.mxu0 0.0
    %1147 = vmatprep.subr.mxu0 0.0
    %1148 = vmatpush1.msra.mxu0 0.0
    %1149 = vmatprep.subr.mxu0 0.0
    %1150 = vmatpush1.msra.mxu0 0.0
    %1151 = vmatprep.subr.mxu0 0.0
    %1152 = vmatpush1.msra.mxu0 0.0
    %1153 = vmatprep.subr.mxu0 0.0
    %1154 = vmatpush1.msra.mxu0 0.0
    %1155 = vmatprep.subr.mxu0 0.0
    %1156 = vmatpush1.msra.mxu0 0.0
    %1157 = vmatprep.subr.mxu0 0.0
    %1158 = vmatpush1.msra.mxu0 0.0
    %1159 = vmatprep.subr.mxu0 0.0
    %1160 = vmatpush1.msra.mxu0 0.0
    %1161 = vmatprep.subr.mxu0 0.0
    %1162 = vmatpush1.msra.mxu0 0.0
    %1163 = vmatprep.subr.mxu0 0.0
    %1164 = vmatpush1.msra.mxu0 0.0
    %1165 = vmatprep.subr.mxu0 0.0
    %1166 = vmatpush1.msra.mxu0 0.0
    %1167 = vmatprep.subr.mxu0 0.0
    %1168 = vmatpush1.msra.mxu0 0.0
    %1169 = vmatprep.subr.mxu0 0.0
    %1170 = vmatpush1.msra.mxu0 0.0
    %1171 = vmatprep.subr.mxu0 0.0
    %1172 = vmatpush1.msra.mxu0 0.0
    %1173 = vmatprep.subr.mxu0 0.0
    %1174 = vmatpush1.msra.mxu0 0.0
    %1175 = vmatprep.subr.mxu0 0.0
    %1176 = vmatpush1.msra.mxu0 0.0
    %1177 = vmatprep.subr.mxu0 0.0
    %1178 = vmatpush1.msra.mxu0 0.0
    %1179 = vmatprep.subr.mxu0 0.0
    %1180 = vmatpush1.msra.mxu0 0.0
    %1181 = vmatprep.subr.mxu0 0.0
    %1182 = vmatpush1.msra.mxu0 0.0
    %1183 = vmatprep.subr.mxu0 0.0
    %1184 = vmatpush1.msra.mxu0 0.0
    %1185 = vmatprep.subr.mxu0 0.0
    %1186 = vmatpush1.msra.mxu0 0.0
    %1187 = vmatprep.mubr.f32.mxu0 0.0
    %1188 = vmatmul.mubr.f32.gmra.mrb[0].mxu0 %v1121
    %v1189 = vpop.f32.mrb[0].mxu0
    %v1190 = vadd.f32 0.0, %v1189
    %v1191 = vpop.f32.mrb[0].mxu0
    %1192 = vdwg.mxu0
    %vm1193 = vcmp.gt.f32.partialorder %v1190, 0.0
    %v1194 = vmin.f32 %v1190, 0.0
    %v1195 = vmul.f32 %v1194, 1.442695
    %v1196 = vpow.pop %v1195
    %v1197 = vsub.f32 %v1196, 1.0
    %v1198 = vsel %vm1193, %v1190, %v1197
    %v1199 = vld [vmem:[%s4] sm:$0xff]
    %s1200 = scalar_lea.vmem %s4, 8
    %v1201 = vld [vmem:[%s1200] sm:$0xff]
    %v1203 = vsel %vm119, %v620, 0
    %1205 = vmatprep.subr.mxu0 0.0
    %1206 = vmatpush1.msra.mxu0 %v1201
    %1207 = vmatprep.subr.mxu0 0.0
    %1208 = vmatpush1.msra.mxu0 0.0
    %1209 = vmatprep.subr.mxu0 0.0
    %1210 = vmatpush1.msra.mxu0 0.0
    %1211 = vmatprep.subr.mxu0 0.0
    %1212 = vmatpush1.msra.mxu0 0.0
    %1213 = vmatprep.subr.mxu0 0.0
    %1214 = vmatpush1.msra.mxu0 0.0
    %1215 = vmatprep.subr.mxu0 0.0
    %1216 = vmatpush1.msra.mxu0 0.0
    %1217 = vmatprep.subr.mxu0 0.0
    %1218 = vmatpush1.msra.mxu0 0.0
    %1219 = vmatprep.subr.mxu0 0.0
    %1220 = vmatpush1.msra.mxu0 0.0
    %1221 = vmatprep.subr.mxu0 0.0
    %1222 = vmatpush1.msra.mxu0 0.0
    %1223 = vmatprep.subr.mxu0 0.0
    %1224 = vmatpush1.msra.mxu0 0.0
    %1225 = vmatprep.subr.mxu0 0.0
    %1226 = vmatpush1.msra.mxu0 0.0
    %1227 = vmatprep.subr.mxu0 0.0
    %1228 = vmatpush1.msra.mxu0 0.0
    %1229 = vmatprep.subr.mxu0 0.0
    %1230 = vmatpush1.msra.mxu0 0.0
    %1231 = vmatprep.subr.mxu0 0.0
    %1232 = vmatpush1.msra.mxu0 0.0
    %1233 = vmatprep.subr.mxu0 0.0
    %1234 = vmatpush1.msra.mxu0 0.0
    %1235 = vmatprep.subr.mxu0 0.0
    %1236 = vmatpush1.msra.mxu0 0.0
    %1237 = vmatprep.subr.mxu0 0.0
    %1238 = vmatpush1.msra.mxu0 0.0
    %1239 = vmatprep.subr.mxu0 0.0
    %1240 = vmatpush1.msra.mxu0 0.0
    %1241 = vmatprep.subr.mxu0 0.0
    %1242 = vmatpush1.msra.mxu0 0.0
    %1243 = vmatprep.subr.mxu0 0.0
    %1244 = vmatpush1.msra.mxu0 0.0
    %1245 = vmatprep.subr.mxu0 0.0
    %1246 = vmatpush1.msra.mxu0 0.0
    %1247 = vmatprep.subr.mxu0 0.0
    %1248 = vmatpush1.msra.mxu0 0.0
    %1249 = vmatprep.subr.mxu0 0.0
    %1250 = vmatpush1.msra.mxu0 0.0
    %1251 = vmatprep.subr.mxu0 0.0
    %1252 = vmatpush1.msra.mxu0 0.0
    %1253 = vmatprep.subr.mxu0 0.0
    %1254 = vmatpush1.msra.mxu0 0.0
    %1255 = vmatprep.subr.mxu0 0.0
    %1256 = vmatpush1.msra.mxu0 0.0
    %1257 = vmatprep.subr.mxu0 0.0
    %1258 = vmatpush1.msra.mxu0 0.0
    %1259 = vmatprep.subr.mxu0 0.0
    %1260 = vmatpush1.msra.mxu0 0.0
    %1261 = vmatprep.subr.mxu0 0.0
    %1262 = vmatpush1.msra.mxu0 0.0
    %1263 = vmatprep.subr.mxu0 0.0
    %1264 = vmatpush1.msra.mxu0 0.0
    %1265 = vmatprep.subr.mxu0 0.0
    %1266 = vmatpush1.msra.mxu0 0.0
    %1267 = vmatprep.subr.mxu0 0.0
    %1268 = vmatpush1.msra.mxu0 0.0
    %1269 = vmatprep.mubr.f32.mxu0 0.0
    %1270 = vmatmul.mubr.f32.gmra.mrb[0].mxu0 %v1203
    %v1271 = vpop.f32.mrb[0].mxu0
    %v1272 = vadd.f32 0.0, %v1271
    %v1273 = vpop.f32.mrb[0].mxu0
    %1274 = vdwg.mxu0
    %v1276 = vsel %vm119, %v331, 0
    %1278 = vmatprep.subr.mxu0 0.0
    %1279 = vmatpush1.msra.mxu0 %v1199
    %1280 = vmatprep.subr.mxu0 0.0
    %1281 = vmatpush1.msra.mxu0 0.0
    %1282 = vmatprep.subr.mxu0 0.0
    %1283 = vmatpush1.msra.mxu0 0.0
    %1284 = vmatprep.subr.mxu0 0.0
    %1285 = vmatpush1.msra.mxu0 0.0
    %1286 = vmatprep.subr.mxu0 0.0
    %1287 = vmatpush1.msra.mxu0 0.0
    %1288 = vmatprep.subr.mxu0 0.0
    %1289 = vmatpush1.msra.mxu0 0.0
    %1290 = vmatprep.subr.mxu0 0.0
    %1291 = vmatpush1.msra.mxu0 0.0
    %1292 = vmatprep.subr.mxu0 0.0
    %1293 = vmatpush1.msra.mxu0 0.0
    %1294 = vmatprep.subr.mxu0 0.0
    %1295 = vmatpush1.msra.mxu0 0.0
    %1296 = vmatprep.subr.mxu0 0.0
    %1297 = vmatpush1.msra.mxu0 0.0
    %1298 = vmatprep.subr.mxu0 0.0
    %1299 = vmatpush1.msra.mxu0 0.0
    %1300 = vmatprep.subr.mxu0 0.0
    %1301 = vmatpush1.msra.mxu0 0.0
    %1302 = vmatprep.subr.mxu0 0.0
    %1303 = vmatpush1.msra.mxu0 0.0
    %1304 = vmatprep.subr.mxu0 0.0
    %1305 = vmatpush1.msra.mxu0 0.0
    %1306 = vmatprep.subr.mxu0 0.0
    %1307 = vmatpush1.msra.mxu0 0.0
    %1308 = vmatprep.subr.mxu0 0.0
    %1309 = vmatpush1.msra.mxu0 0.0
    %1310 = vmatprep.subr.mxu0 0.0
    %1311 = vmatpush1.msra.mxu0 0.0
    %1312 = vmatprep.subr.mxu0 0.0
    %1313 = vmatpush1.msra.mxu0 0.0
    %1314 = vmatprep.subr.mxu0 0.0
    %1315 = vmatpush1.msra.mxu0 0.0
    %1316 = vmatprep.subr.mxu0 0.0
    %1317 = vmatpush1.msra.mxu0 0.0
    %1318 = vmatprep.subr.mxu0 0.0
    %1319 = vmatpush1.msra.mxu0 0.0
    %1320 = vmatprep.subr.mxu0 0.0
    %1321 = vmatpush1.msra.mxu0 0.0
    %1322 = vmatprep.subr.mxu0 0.0
    %1323 = vmatpush1.msra.mxu0 0.0
    %1324 = vmatprep.subr.mxu0 0.0
    %1325 = vmatpush1.msra.mxu0 0.0
    %1326 = vmatprep.subr.mxu0 0.0
    %1327 = vmatpush1.msra.mxu0 0.0
    %1328 = vmatprep.subr.mxu0 0.0
    %1329 = vmatpush1.msra.mxu0 0.0
    %1330 = vmatprep.subr.mxu0 0.0
    %1331 = vmatpush1.msra.mxu0 0.0
    %1332 = vmatprep.subr.mxu0 0.0
    %1333 = vmatpush1.msra.mxu0 0.0
    %1334 = vmatprep.subr.mxu0 0.0
    %1335 = vmatpush1.msra.mxu0 0.0
    %1336 = vmatprep.subr.mxu0 0.0
    %1337 = vmatpush1.msra.mxu0 0.0
    %1338 = vmatprep.subr.mxu0 0.0
    %1339 = vmatpush1.msra.mxu0 0.0
    %1340 = vmatprep.subr.mxu0 0.0
    %1341 = vmatpush1.msra.mxu0 0.0
    %1342 = vmatprep.mubr.f32.mxu0 0.0
    %1343 = vmatmul.mubr.f32.gmra.mrb[0].mxu0 %v1276
    %v1344 = vpop.f32.mrb[0].mxu0
    %v1345 = vadd.f32 %v1272, %v1344
    %v1346 = vpop.f32.mrb[0].mxu0
    %1347 = vdwg.mxu0
    %s1348 = scalar_lea.vmem %s4, 16
    %v1349 = vld [vmem:[%s1348] sm:$0xff]
    %v1351 = vsel %vm119, %v909, 0
    %1353 = vmatprep.subr.mxu0 0.0
    %1354 = vmatpush1.msra.mxu0 %v1349
    %1355 = vmatprep.subr.mxu0 0.0
    %1356 = vmatpush1.msra.mxu0 0.0
    %1357 = vmatprep.subr.mxu0 0.0
    %1358 = vmatpush1.msra.mxu0 0.0
    %1359 = vmatprep.subr.mxu0 0.0
    %1360 = vmatpush1.msra.mxu0 0.0
    %1361 = vmatprep.subr.mxu0 0.0
    %1362 = vmatpush1.msra.mxu0 0.0
    %1363 = vmatprep.subr.mxu0 0.0
    %1364 = vmatpush1.msra.mxu0 0.0
    %1365 = vmatprep.subr.mxu0 0.0
    %1366 = vmatpush1.msra.mxu0 0.0
    %1367 = vmatprep.subr.mxu0 0.0
    %1368 = vmatpush1.msra.mxu0 0.0
    %1369 = vmatprep.subr.mxu0 0.0
    %1370 = vmatpush1.msra.mxu0 0.0
    %1371 = vmatprep.subr.mxu0 0.0
    %1372 = vmatpush1.msra.mxu0 0.0
    %1373 = vmatprep.subr.mxu0 0.0
    %1374 = vmatpush1.msra.mxu0 0.0
    %1375 = vmatprep.subr.mxu0 0.0
    %1376 = vmatpush1.msra.mxu0 0.0
    %1377 = vmatprep.subr.mxu0 0.0
    %1378 = vmatpush1.msra.mxu0 0.0
    %1379 = vmatprep.subr.mxu0 0.0
    %1380 = vmatpush1.msra.mxu0 0.0
    %1381 = vmatprep.subr.mxu0 0.0
    %1382 = vmatpush1.msra.mxu0 0.0
    %1383 = vmatprep.subr.mxu0 0.0
    %1384 = vmatpush1.msra.mxu0 0.0
    %1385 = vmatprep.subr.mxu0 0.0
    %1386 = vmatpush1.msra.mxu0 0.0
    %1387 = vmatprep.subr.mxu0 0.0
    %1388 = vmatpush1.msra.mxu0 0.0
    %1389 = vmatprep.subr.mxu0 0.0
    %1390 = vmatpush1.msra.mxu0 0.0
    %1391 = vmatprep.subr.mxu0 0.0
    %1392 = vmatpush1.msra.mxu0 0.0
    %1393 = vmatprep.subr.mxu0 0.0
    %1394 = vmatpush1.msra.mxu0 0.0
    %1395 = vmatprep.subr.mxu0 0.0
    %1396 = vmatpush1.msra.mxu0 0.0
    %1397 = vmatprep.subr.mxu0 0.0
    %1398 = vmatpush1.msra.mxu0 0.0
    %1399 = vmatprep.subr.mxu0 0.0
    %1400 = vmatpush1.msra.mxu0 0.0
    %1401 = vmatprep.subr.mxu0 0.0
    %1402 = vmatpush1.msra.mxu0 0.0
    %1403 = vmatprep.subr.mxu0 0.0
    %1404 = vmatpush1.msra.mxu0 0.0
    %1405 = vmatprep.subr.mxu0 0.0
    %1406 = vmatpush1.msra.mxu0 0.0
    %1407 = vmatprep.subr.mxu0 0.0
    %1408 = vmatpush1.msra.mxu0 0.0
    %1409 = vmatprep.subr.mxu0 0.0
    %1410 = vmatpush1.msra.mxu0 0.0
    %1411 = vmatprep.subr.mxu0 0.0
    %1412 = vmatpush1.msra.mxu0 0.0
    %1413 = vmatprep.subr.mxu0 0.0
    %1414 = vmatpush1.msra.mxu0 0.0
    %1415 = vmatprep.subr.mxu0 0.0
    %1416 = vmatpush1.msra.mxu0 0.0
    %1417 = vmatprep.mubr.f32.mxu0 0.0
    %1418 = vmatmul.mubr.f32.gmra.mrb[0].mxu0 %v1351
    %v1419 = vpop.f32.mrb[0].mxu0
    %v1420 = vadd.f32 0.0, %v1419
    %v1421 = vpop.f32.mrb[0].mxu0
    %1422 = vdwg.mxu0
    %v1423 = vadd.f32 %v1345, %v1420
    %s1424 = scalar_lea.vmem %s4, 24
    %v1425 = vld [vmem:[%s1424] sm:$0xff]
    %v1427 = vsel %vm119, %v1198, 0
    %1429 = vmatprep.subr.mxu0 0.0
    %1430 = vmatpush1.msra.mxu0 %v1425
    %1431 = vmatprep.subr.mxu0 0.0
    %1432 = vmatpush1.msra.mxu0 0.0
    %1433 = vmatprep.subr.mxu0 0.0
    %1434 = vmatpush1.msra.mxu0 0.0
    %1435 = vmatprep.subr.mxu0 0.0
    %1436 = vmatpush1.msra.mxu0 0.0
    %1437 = vmatprep.subr.mxu0 0.0
    %1438 = vmatpush1.msra.mxu0 0.0
    %1439 = vmatprep.subr.mxu0 0.0
    %1440 = vmatpush1.msra.mxu0 0.0
    %1441 = vmatprep.subr.mxu0 0.0
    %1442 = vmatpush1.msra.mxu0 0.0
    %1443 = vmatprep.subr.mxu0 0.0
    %1444 = vmatpush1.msra.mxu0 0.0
    %1445 = vmatprep.subr.mxu0 0.0
    %1446 = vmatpush1.msra.mxu0 0.0
    %1447 = vmatprep.subr.mxu0 0.0
    %1448 = vmatpush1.msra.mxu0 0.0
    %1449 = vmatprep.subr.mxu0 0.0
    %1450 = vmatpush1.msra.mxu0 0.0
    %1451 = vmatprep.subr.mxu0 0.0
    %1452 = vmatpush1.msra.mxu0 0.0
    %1453 = vmatprep.subr.mxu0 0.0
    %1454 = vmatpush1.msra.mxu0 0.0
    %1455 = vmatprep.subr.mxu0 0.0
    %1456 = vmatpush1.msra.mxu0 0.0
    %1457 = vmatprep.subr.mxu0 0.0
    %1458 = vmatpush1.msra.mxu0 0.0
    %1459 = vmatprep.subr.mxu0 0.0
    %1460 = vmatpush1.msra.mxu0 0.0
    %1461 = vmatprep.subr.mxu0 0.0
    %1462 = vmatpush1.msra.mxu0 0.0
    %1463 = vmatprep.subr.mxu0 0.0
    %1464 = vmatpush1.msra.mxu0 0.0
    %1465 = vmatprep.subr.mxu0 0.0
    %1466 = vmatpush1.msra.mxu0 0.0
    %1467 = vmatprep.subr.mxu0 0.0
    %1468 = vmatpush1.msra.mxu0 0.0
    %1469 = vmatprep.subr.mxu0 0.0
    %1470 = vmatpush1.msra.mxu0 0.0
    %1471 = vmatprep.subr.mxu0 0.0
    %1472 = vmatpush1.msra.mxu0 0.0
    %1473 = vmatprep.subr.mxu0 0.0
    %1474 = vmatpush1.msra.mxu0 0.0
    %1475 = vmatprep.subr.mxu0 0.0
    %1476 = vmatpush1.msra.mxu0 0.0
    %1477 = vmatprep.subr.mxu0 0.0
    %1478 = vmatpush1.msra.mxu0 0.0
    %1479 = vmatprep.subr.mxu0 0.0
    %1480 = vmatpush1.msra.mxu0 0.0
    %1481 = vmatprep.subr.mxu0 0.0
    %1482 = vmatpush1.msra.mxu0 0.0
    %1483 = vmatprep.subr.mxu0 0.0
    %1484 = vmatpush1.msra.mxu0 0.0
    %1485 = vmatprep.subr.mxu0 0.0
    %1486 = vmatpush1.msra.mxu0 0.0
    %1487 = vmatprep.subr.mxu0 0.0
    %1488 = vmatpush1.msra.mxu0 0.0
    %1489 = vmatprep.subr.mxu0 0.0
    %1490 = vmatpush1.msra.mxu0 0.0
    %1491 = vmatprep.subr.mxu0 0.0
    %1492 = vmatpush1.msra.mxu0 0.0
    %1493 = vmatprep.mubr.f32.mxu0 0.0
    %1494 = vmatmul.mubr.f32.gmra.mrb[0].mxu0 %v1427
    %v1495 = vpop.f32.mrb[0].mxu0
    %v1496 = vadd.f32 0.0, %v1495
    %v1497 = vpop.f32.mrb[0].mxu0
    %1498 = vdwg.mxu0
    %v1499 = vadd.f32 %v1423, %v1496
    %v1500 = vld [vmem:[%s5] sm:$0xff]
    %v1502 = vsel %vm119, %v1499, 0
    %1504 = vmatprep.subr.mxu0 0.0
    %1505 = vmatpush1.msra.mxu0 %v1500
    %1506 = vmatprep.subr.mxu0 0.0
    %1507 = vmatpush1.msra.mxu0 0.0
    %1508 = vmatprep.subr.mxu0 0.0
    %1509 = vmatpush1.msra.mxu0 0.0
    %1510 = vmatprep.subr.mxu0 0.0
    %1511 = vmatpush1.msra.mxu0 0.0
    %1512 = vmatprep.subr.mxu0 0.0
    %1513 = vmatpush1.msra.mxu0 0.0
    %1514 = vmatprep.subr.mxu0 0.0
    %1515 = vmatpush1.msra.mxu0 0.0
    %1516 = vmatprep.subr.mxu0 0.0
    %1517 = vmatpush1.msra.mxu0 0.0
    %1518 = vmatprep.subr.mxu0 0.0
    %1519 = vmatpush1.msra.mxu0 0.0
    %1520 = vmatprep.subr.mxu0 0.0
    %1521 = vmatpush1.msra.mxu0 0.0
    %1522 = vmatprep.subr.mxu0 0.0
    %1523 = vmatpush1.msra.mxu0 0.0
    %1524 = vmatprep.subr.mxu0 0.0
    %1525 = vmatpush1.msra.mxu0 0.0
    %1526 = vmatprep.subr.mxu0 0.0
    %1527 = vmatpush1.msra.mxu0 0.0
    %1528 = vmatprep.subr.mxu0 0.0
    %1529 = vmatpush1.msra.mxu0 0.0
    %1530 = vmatprep.subr.mxu0 0.0
    %1531 = vmatpush1.msra.mxu0 0.0
    %1532 = vmatprep.subr.mxu0 0.0
    %1533 = vmatpush1.msra.mxu0 0.0
    %1534 = vmatprep.subr.mxu0 0.0
    %1535 = vmatpush1.msra.mxu0 0.0
    %1536 = vmatprep.subr.mxu0 0.0
    %1537 = vmatpush1.msra.mxu0 0.0
    %1538 = vmatprep.subr.mxu0 0.0
    %1539 = vmatpush1.msra.mxu0 0.0
    %1540 = vmatprep.subr.mxu0 0.0
    %1541 = vmatpush1.msra.mxu0 0.0
    %1542 = vmatprep.subr.mxu0 0.0
    %1543 = vmatpush1.msra.mxu0 0.0
    %1544 = vmatprep.subr.mxu0 0.0
    %1545 = vmatpush1.msra.mxu0 0.0
    %1546 = vmatprep.subr.mxu0 0.0
    %1547 = vmatpush1.msra.mxu0 0.0
    %1548 = vmatprep.subr.mxu0 0.0
    %1549 = vmatpush1.msra.mxu0 0.0
    %1550 = vmatprep.subr.mxu0 0.0
    %1551 = vmatpush1.msra.mxu0 0.0
    %1552 = vmatprep.subr.mxu0 0.0
    %1553 = vmatpush1.msra.mxu0 0.0
    %1554 = vmatprep.subr.mxu0 0.0
    %1555 = vmatpush1.msra.mxu0 0.0
    %1556 = vmatprep.subr.mxu0 0.0
    %1557 = vmatpush1.msra.mxu0 0.0
    %1558 = vmatprep.subr.mxu0 0.0
    %1559 = vmatpush1.msra.mxu0 0.0
    %1560 = vmatprep.subr.mxu0 0.0
    %1561 = vmatpush1.msra.mxu0 0.0
    %1562 = vmatprep.subr.mxu0 0.0
    %1563 = vmatpush1.msra.mxu0 0.0
    %1564 = vmatprep.subr.mxu0 0.0
    %1565 = vmatpush1.msra.mxu0 0.0
    %1566 = vmatprep.subr.mxu0 0.0
    %1567 = vmatpush1.msra.mxu0 0.0
    %1568 = vmatprep.mubr.f32.mxu0 0.0
    %1569 = vmatmul.mubr.f32.gmra.mrb[0].mxu0 %v1502
    %v1570 = vpop.f32.mrb[0].mxu0
    %v1571 = vadd.f32 0.0, %v1570
    %v1572 = vpop.f32.mrb[0].mxu0
    %1573 = vdwg.mxu0
    %1575 = vrot.lane.b32.xlu0 %v1571, 127
    %v1576 = vpop.permute.xlu0 %1575
    %1578 = vxpose.xlu0.b32.start [1/16] %v1576, 128
    %1579 = vxpose.xlu0.b32.cont [2/16] 0.0, 128
    %1580 = vxpose.xlu0.b32.cont [3/16] 0.0, 128
    %1581 = vxpose.xlu0.b32.cont [4/16] 0.0, 128
    %1582 = vxpose.xlu0.b32.cont [5/16] 0.0, 128
    %1583 = vxpose.xlu0.b32.cont [6/16] 0.0, 128
    %1584 = vxpose.xlu0.b32.cont [7/16] 0.0, 128
    %1585 = vxpose.xlu0.b32.cont [8/16] 0.0, 128
    %1586 = vxpose.xlu0.b32.cont [9/16] 0.0, 128
    %1587 = vxpose.xlu0.b32.cont [10/16] 0.0, 128
    %1588 = vxpose.xlu0.b32.cont [11/16] 0.0, 128
    %1589 = vxpose.xlu0.b32.cont [12/16] 0.0, 128
    %1590 = vxpose.xlu0.b32.cont [13/16] 0.0, 128
    %1591 = vxpose.xlu0.b32.cont [14/16] 0.0, 128
    %1592 = vxpose.xlu0.b32.cont [15/16] 0.0, 128
    %1593 = vxpose.xlu0.b32.end [16/16] 0.0, 128
    %v1594 = vpop.trf.xlu0
    %v1595 = vpop.trf.xlu0
    %v1596 = vpop.trf.xlu0
    %v1597 = vpop.trf.xlu0
    %v1598 = vpop.trf.xlu0
    %v1599 = vpop.trf.xlu0
    %v1600 = vpop.trf.xlu0
    %v1601 = vpop.trf.xlu0
    %v1602 = vpop.trf.xlu0
    %v1603 = vpop.trf.xlu0
    %v1604 = vpop.trf.xlu0
    %v1605 = vpop.trf.xlu0
    %v1606 = vpop.trf.xlu0
    %v1607 = vpop.trf.xlu0
    %v1608 = vpop.trf.xlu0
    %v1609 = vpop.trf.xlu0
    %1610 = vset.pattern.permute.xlu0 0
    %1611 = vperm.xlu0 %1610, %v1571
    %v1612 = vpop.permute.xlu0 %1611
    %v1614 = vlaneseq
    %v1615 = vshrl.u32 %v1614, 7
    %v1616 = vsub.s32 0, %v1615
    %v1617 = vrot.slane %v1594, %v1616
    %v1618 = vadd.f32 %v1612, %v1617
    %vm1619 = vcmp.gt.f32.partialorder %v1618, 0.0
    %v1620 = vmul.f32 %v1618, 0.2
    %v1621 = vsel %vm1619, %v1618, %v1620
    %v1622 = vadd.f32 %v1621, %v38
    %v1623 = vsel %vm119, %v1622, -inf
    %1624 = vmax.xlane.f32.xlu0 %v1623
    %v1625 = vpop.xlane.xlu0 %1624
    %v1626 = vsub.f32 %v1622, %v1625
    %v1627 = vmul.f32 %v1626, 1.442695
    %v1628 = vpow.pop %v1627
    %v1629 = vsel %vm119, %v1628, 0.0
    %1630 = vadd.xlane.f32.xlu0 %v1629
    %v1631 = vpop.xlane.xlu0 %1630
    %v1632 = vrcp.pop %v1631
    %v1633 = vmul.f32 %v1628, %v1632
    %v1635 = vsel %vm119, %v1633, 0
    %1637 = vmatprep.subr.mxu0 0.0
    %1638 = vmatpush1.msra.mxu0 %v1499
    %1639 = vmatprep.subr.mxu0 0.0
    %1640 = vmatpush1.msra.mxu0 0.0
    %1641 = vmatprep.subr.mxu0 0.0
    %1642 = vmatpush1.msra.mxu0 0.0
    %1643 = vmatprep.subr.mxu0 0.0
    %1644 = vmatpush1.msra.mxu0 0.0
    %1645 = vmatprep.subr.mxu0 0.0
    %1646 = vmatpush1.msra.mxu0 0.0
    %1647 = vmatprep.subr.mxu0 0.0
    %1648 = vmatpush1.msra.mxu0 0.0
    %1649 = vmatprep.subr.mxu0 0.0
    %1650 = vmatpush1.msra.mxu0 0.0
    %1651 = vmatprep.subr.mxu0 0.0
    %1652 = vmatpush1.msra.mxu0 0.0
    %1653 = vmatprep.subr.mxu0 0.0
    %1654 = vmatpush1.msra.mxu0 0.0
    %1655 = vmatprep.subr.mxu0 0.0
    %1656 = vmatpush1.msra.mxu0 0.0
    %1657 = vmatprep.subr.mxu0 0.0
    %1658 = vmatpush1.msra.mxu0 0.0
    %1659 = vmatprep.subr.mxu0 0.0
    %1660 = vmatpush1.msra.mxu0 0.0
    %1661 = vmatprep.subr.mxu0 0.0
    %1662 = vmatpush1.msra.mxu0 0.0
    %1663 = vmatprep.subr.mxu0 0.0
    %1664 = vmatpush1.msra.mxu0 0.0
    %1665 = vmatprep.subr.mxu0 0.0
    %1666 = vmatpush1.msra.mxu0 0.0
    %1667 = vmatprep.subr.mxu0 0.0
    %1668 = vmatpush1.msra.mxu0 0.0
    %1669 = vmatprep.subr.mxu0 0.0
    %1670 = vmatpush1.msra.mxu0 0.0
    %1671 = vmatprep.subr.mxu0 0.0
    %1672 = vmatpush1.msra.mxu0 0.0
    %1673 = vmatprep.subr.mxu0 0.0
    %1674 = vmatpush1.msra.mxu0 0.0
    %1675 = vmatprep.subr.mxu0 0.0
    %1676 = vmatpush1.msra.mxu0 0.0
    %1677 = vmatprep.subr.mxu0 0.0
    %1678 = vmatpush1.msra.mxu0 0.0
    %1679 = vmatprep.subr.mxu0 0.0
    %1680 = vmatpush1.msra.mxu0 0.0
    %1681 = vmatprep.subr.mxu0 0.0
    %1682 = vmatpush1.msra.mxu0 0.0
    %1683 = vmatprep.subr.mxu0 0.0
    %1684 = vmatpush1.msra.mxu0 0.0
    %1685 = vmatprep.subr.mxu0 0.0
    %1686 = vmatpush1.msra.mxu0 0.0
    %1687 = vmatprep.subr.mxu0 0.0
    %1688 = vmatpush1.msra.mxu0 0.0
    %1689 = vmatprep.subr.mxu0 0.0
    %1690 = vmatpush1.msra.mxu0 0.0
    %1691 = vmatprep.subr.mxu0 0.0
    %1692 = vmatpush1.msra.mxu0 0.0
    %1693 = vmatprep.subr.mxu0 0.0
    %1694 = vmatpush1.msra.mxu0 0.0
    %1695 = vmatprep.subr.mxu0 0.0
    %1696 = vmatpush1.msra.mxu0 0.0
    %1697 = vmatprep.subr.mxu0 0.0
    %1698 = vmatpush1.msra.mxu0 0.0
    %1699 = vmatprep.subr.mxu0 0.0
    %1700 = vmatpush1.msra.mxu0 0.0
    %1701 = vmatprep.mubr.f32.mxu0 0.0
    %1702 = vmatmul.mubr.f32.gmra.mrb[0].mxu0 %v1635
    %v1703 = vpop.f32.mrb[0].mxu0
    %v1704 = vadd.f32 0.0, %v1703
    %v1705 = vpop.f32.mrb[0].mxu0
    %1706 = vdwg.mxu0
    %vm1707 = vcmp.gt.f32.partialorder %v1704, 0.0
    %v1708 = vmin.f32 %v1704, 0.0
    %v1709 = vmul.f32 %v1708, 1.442695
    %v1710 = vpow.pop %v1709
    %v1711 = vsub.f32 %v1710, 1.0
    %v1712 = vsel %vm1707, %v1704, %v1711
    %vm1713 = vcmp.gt.f32.partialorder %v1712, 0.0
    %v1714 = vmin.f32 %v1712, 0.0
    %v1715 = vmul.f32 %v1714, 1.442695
    %v1716 = vpow.pop %v1715
    %v1717 = vsub.f32 %v1716, 1.0
    %v1718 = vsel %vm1713, %v1712, %v1717
    %v1719 = vld [vmem:[%s6] sm:$0xff]
    %v1721 = vsel %vm119, %v1718, 0
    %1723 = vmatprep.subr.mxu0 0.0
    %1724 = vmatpush1.msra.mxu0 %v1719
    %1725 = vmatprep.subr.mxu0 0.0
    %1726 = vmatpush1.msra.mxu0 0.0
    %1727 = vmatprep.subr.mxu0 0.0
    %1728 = vmatpush1.msra.mxu0 0.0
    %1729 = vmatprep.subr.mxu0 0.0
    %1730 = vmatpush1.msra.mxu0 0.0
    %1731 = vmatprep.subr.mxu0 0.0
    %1732 = vmatpush1.msra.mxu0 0.0
    %1733 = vmatprep.subr.mxu0 0.0
    %1734 = vmatpush1.msra.mxu0 0.0
    %1735 = vmatprep.subr.mxu0 0.0
    %1736 = vmatpush1.msra.mxu0 0.0
    %1737 = vmatprep.subr.mxu0 0.0
    %1738 = vmatpush1.msra.mxu0 0.0
    %1739 = vmatprep.subr.mxu0 0.0
    %1740 = vmatpush1.msra.mxu0 0.0
    %1741 = vmatprep.subr.mxu0 0.0
    %1742 = vmatpush1.msra.mxu0 0.0
    %1743 = vmatprep.subr.mxu0 0.0
    %1744 = vmatpush1.msra.mxu0 0.0
    %1745 = vmatprep.subr.mxu0 0.0
    %1746 = vmatpush1.msra.mxu0 0.0
    %1747 = vmatprep.subr.mxu0 0.0
    %1748 = vmatpush1.msra.mxu0 0.0
    %1749 = vmatprep.subr.mxu0 0.0
    %1750 = vmatpush1.msra.mxu0 0.0
    %1751 = vmatprep.subr.mxu0 0.0
    %1752 = vmatpush1.msra.mxu0 0.0
    %1753 = vmatprep.subr.mxu0 0.0
    %1754 = vmatpush1.msra.mxu0 0.0
    %1755 = vmatprep.subr.mxu0 0.0
    %1756 = vmatpush1.msra.mxu0 0.0
    %1757 = vmatprep.subr.mxu0 0.0
    %1758 = vmatpush1.msra.mxu0 0.0
    %1759 = vmatprep.subr.mxu0 0.0
    %1760 = vmatpush1.msra.mxu0 0.0
    %1761 = vmatprep.subr.mxu0 0.0
    %1762 = vmatpush1.msra.mxu0 0.0
    %1763 = vmatprep.subr.mxu0 0.0
    %1764 = vmatpush1.msra.mxu0 0.0
    %1765 = vmatprep.subr.mxu0 0.0
    %1766 = vmatpush1.msra.mxu0 0.0
    %1767 = vmatprep.subr.mxu0 0.0
    %1768 = vmatpush1.msra.mxu0 0.0
    %1769 = vmatprep.subr.mxu0 0.0
    %1770 = vmatpush1.msra.mxu0 0.0
    %1771 = vmatprep.subr.mxu0 0.0
    %1772 = vmatpush1.msra.mxu0 0.0
    %1773 = vmatprep.subr.mxu0 0.0
    %1774 = vmatpush1.msra.mxu0 0.0
    %1775 = vmatprep.subr.mxu0 0.0
    %1776 = vmatpush1.msra.mxu0 0.0
    %1777 = vmatprep.subr.mxu0 0.0
    %1778 = vmatpush1.msra.mxu0 0.0
    %1779 = vmatprep.subr.mxu0 0.0
    %1780 = vmatpush1.msra.mxu0 0.0
    %1781 = vmatprep.subr.mxu0 0.0
    %1782 = vmatpush1.msra.mxu0 0.0
    %1783 = vmatprep.subr.mxu0 0.0
    %1784 = vmatpush1.msra.mxu0 0.0
    %1785 = vmatprep.subr.mxu0 0.0
    %1786 = vmatpush1.msra.mxu0 0.0
    %1787 = vmatprep.mubr.f32.mxu0 0.0
    %1788 = vmatmul.mubr.f32.gmra.mrb[0].mxu0 %v1721
    %v1789 = vpop.f32.mrb[0].mxu0
    %v1790 = vadd.f32 0.0, %v1789
    %v1791 = vpop.f32.mrb[0].mxu0
    %1792 = vdwg.mxu0
    %v1793 = vld [vmem:[%s7] sm:$0xff]
    %v1794 = vld [vmem:[%s7 + $0x8] sm:$0xff]
    %vm1795 = vcmask 130048
    %v1797 = vsel %vm1795, %v1790, 0
    %1799 = vmatprep.subr.mxu0 0.0
    %1800 = vmatpush1.msra.mxu0 %v1793
    %1801 = vmatprep.subr.mxu0 0.0
    %1802 = vmatpush1.msra.mxu0 %v1794
    %1803 = vmatprep.subr.mxu0 0.0
    %1804 = vmatpush1.msra.mxu0 0.0
    %1805 = vmatprep.subr.mxu0 0.0
    %1806 = vmatpush1.msra.mxu0 0.0
    %1807 = vmatprep.subr.mxu0 0.0
    %1808 = vmatpush1.msra.mxu0 0.0
    %1809 = vmatprep.subr.mxu0 0.0
    %1810 = vmatpush1.msra.mxu0 0.0
    %1811 = vmatprep.subr.mxu0 0.0
    %1812 = vmatpush1.msra.mxu0 0.0
    %1813 = vmatprep.subr.mxu0 0.0
    %1814 = vmatpush1.msra.mxu0 0.0
    %1815 = vmatprep.subr.mxu0 0.0
    %1816 = vmatpush1.msra.mxu0 0.0
    %1817 = vmatprep.subr.mxu0 0.0
    %1818 = vmatpush1.msra.mxu0 0.0
    %1819 = vmatprep.subr.mxu0 0.0
    %1820 = vmatpush1.msra.mxu0 0.0
    %1821 = vmatprep.subr.mxu0 0.0
    %1822 = vmatpush1.msra.mxu0 0.0
    %1823 = vmatprep.subr.mxu0 0.0
    %1824 = vmatpush1.msra.mxu0 0.0
    %1825 = vmatprep.subr.mxu0 0.0
    %1826 = vmatpush1.msra.mxu0 0.0
    %1827 = vmatprep.subr.mxu0 0.0
    %1828 = vmatpush1.msra.mxu0 0.0
    %1829 = vmatprep.subr.mxu0 0.0
    %1830 = vmatpush1.msra.mxu0 0.0
    %1831 = vmatprep.subr.mxu0 0.0
    %1832 = vmatpush1.msra.mxu0 0.0
    %1833 = vmatprep.subr.mxu0 0.0
    %1834 = vmatpush1.msra.mxu0 0.0
    %1835 = vmatprep.subr.mxu0 0.0
    %1836 = vmatpush1.msra.mxu0 0.0
    %1837 = vmatprep.subr.mxu0 0.0
    %1838 = vmatpush1.msra.mxu0 0.0
    %1839 = vmatprep.subr.mxu0 0.0
    %1840 = vmatpush1.msra.mxu0 0.0
    %1841 = vmatprep.subr.mxu0 0.0
    %1842 = vmatpush1.msra.mxu0 0.0
    %1843 = vmatprep.subr.mxu0 0.0
    %1844 = vmatpush1.msra.mxu0 0.0
    %1845 = vmatprep.subr.mxu0 0.0
    %1846 = vmatpush1.msra.mxu0 0.0
    %1847 = vmatprep.subr.mxu0 0.0
    %1848 = vmatpush1.msra.mxu0 0.0
    %1849 = vmatprep.subr.mxu0 0.0
    %1850 = vmatpush1.msra.mxu0 0.0
    %1851 = vmatprep.subr.mxu0 0.0
    %1852 = vmatpush1.msra.mxu0 0.0
    %1853 = vmatprep.subr.mxu0 0.0
    %1854 = vmatpush1.msra.mxu0 0.0
    %1855 = vmatprep.subr.mxu0 0.0
    %1856 = vmatpush1.msra.mxu0 0.0
    %1857 = vmatprep.subr.mxu0 0.0
    %1858 = vmatpush1.msra.mxu0 0.0
    %1859 = vmatprep.subr.mxu0 0.0
    %1860 = vmatpush1.msra.mxu0 0.0
    %1861 = vmatprep.subr.mxu0 0.0
    %1862 = vmatpush1.msra.mxu0 0.0
    %1863 = vmatprep.mubr.f32.mxu0 0.0
    %1864 = vmatmul.mubr.f32.gmra.mrb[0].mxu0 %v1797
    %v1865 = vpop.f32.mrb[0].mxu0
    %v1866 = vadd.f32 0.0, %v1865
    %v1867 = vpop.f32.mrb[0].mxu0
    %1868 = vdwg.mxu0
    %1870 = vrot.lane.b32.xlu0 %v1866, 127
    %v1871 = vpop.permute.xlu0 %1870
    %1873 = vxpose.xlu0.b32.start [1/16] %v1871, 128
    %1874 = vxpose.xlu0.b32.cont [2/16] 0.0, 128
    %1875 = vxpose.xlu0.b32.cont [3/16] 0.0, 128
    %1876 = vxpose.xlu0.b32.cont [4/16] 0.0, 128
    %1877 = vxpose.xlu0.b32.cont [5/16] 0.0, 128
    %1878 = vxpose.xlu0.b32.cont [6/16] 0.0, 128
    %1879 = vxpose.xlu0.b32.cont [7/16] 0.0, 128
    %1880 = vxpose.xlu0.b32.cont [8/16] 0.0, 128
    %1881 = vxpose.xlu0.b32.cont [9/16] 0.0, 128
    %1882 = vxpose.xlu0.b32.cont [10/16] 0.0, 128
    %1883 = vxpose.xlu0.b32.cont [11/16] 0.0, 128
    %1884 = vxpose.xlu0.b32.cont [12/16] 0.0, 128
    %1885 = vxpose.xlu0.b32.cont [13/16] 0.0, 128
    %1886 = vxpose.xlu0.b32.cont [14/16] 0.0, 128
    %1887 = vxpose.xlu0.b32.cont [15/16] 0.0, 128
    %1888 = vxpose.xlu0.b32.end [16/16] 0.0, 128
    %v1889 = vpop.trf.xlu0
    %v1890 = vpop.trf.xlu0
    %v1891 = vpop.trf.xlu0
    %v1892 = vpop.trf.xlu0
    %v1893 = vpop.trf.xlu0
    %v1894 = vpop.trf.xlu0
    %v1895 = vpop.trf.xlu0
    %v1896 = vpop.trf.xlu0
    %v1897 = vpop.trf.xlu0
    %v1898 = vpop.trf.xlu0
    %v1899 = vpop.trf.xlu0
    %v1900 = vpop.trf.xlu0
    %v1901 = vpop.trf.xlu0
    %v1902 = vpop.trf.xlu0
    %v1903 = vpop.trf.xlu0
    %v1904 = vpop.trf.xlu0
    %1905 = vset.pattern.permute.xlu0 0
    %1906 = vperm.xlu0 %1905, %v1866
    %v1907 = vpop.permute.xlu0 %1906
    %v1909 = vlaneseq
    %v1910 = vshrl.u32 %v1909, 7
    %v1911 = vsub.s32 0, %v1910
    %v1912 = vrot.slane %v1889, %v1911
    %v1913 = vadd.f32 %v1907, %v1912
    %vm1914 = vcmp.gt.f32.partialorder %v1913, 0.0
    %v1915 = vmul.f32 %v1913, 0.2
    %v1916 = vsel %vm1914, %v1913, %v1915
    %v1917 = vadd.f32 %v1916, %v38
    %v1918 = vsel %vm119, %v1917, -inf
    %1919 = vmax.xlane.f32.xlu0 %v1918
    %v1920 = vpop.xlane.xlu0 %1919
    %v1921 = vsub.f32 %v1917, %v1920
    %v1922 = vmul.f32 %v1921, 1.442695
    %v1923 = vpow.pop %v1922
    %v1924 = vsel %vm119, %v1923, 0.0
    %1925 = vadd.xlane.f32.xlu0 %v1924
    %v1926 = vpop.xlane.xlu0 %1925
    %v1927 = vrcp.pop %v1926
    %v1928 = vmul.f32 %v1923, %v1927
    %v1930 = vsel %vm119, %v1928, 0
    %1932 = vmatprep.subr.mxu0 0.0
    %1933 = vmatpush1.msra.mxu0 %v1790
    %1934 = vmatprep.subr.mxu0 0.0
    %1935 = vmatpush1.msra.mxu0 0.0
    %1936 = vmatprep.subr.mxu0 0.0
    %1937 = vmatpush1.msra.mxu0 0.0
    %1938 = vmatprep.subr.mxu0 0.0
    %1939 = vmatpush1.msra.mxu0 0.0
    %1940 = vmatprep.subr.mxu0 0.0
    %1941 = vmatpush1.msra.mxu0 0.0
    %1942 = vmatprep.subr.mxu0 0.0
    %1943 = vmatpush1.msra.mxu0 0.0
    %1944 = vmatprep.subr.mxu0 0.0
    %1945 = vmatpush1.msra.mxu0 0.0
    %1946 = vmatprep.subr.mxu0 0.0
    %1947 = vmatpush1.msra.mxu0 0.0
    %1948 = vmatprep.subr.mxu0 0.0
    %1949 = vmatpush1.msra.mxu0 0.0
    %1950 = vmatprep.subr.mxu0 0.0
    %1951 = vmatpush1.msra.mxu0 0.0
    %1952 = vmatprep.subr.mxu0 0.0
    %1953 = vmatpush1.msra.mxu0 0.0
    %1954 = vmatprep.subr.mxu0 0.0
    %1955 = vmatpush1.msra.mxu0 0.0
    %1956 = vmatprep.subr.mxu0 0.0
    %1957 = vmatpush1.msra.mxu0 0.0
    %1958 = vmatprep.subr.mxu0 0.0
    %1959 = vmatpush1.msra.mxu0 0.0
    %1960 = vmatprep.subr.mxu0 0.0
    %1961 = vmatpush1.msra.mxu0 0.0
    %1962 = vmatprep.subr.mxu0 0.0
    %1963 = vmatpush1.msra.mxu0 0.0
    %1964 = vmatprep.subr.mxu0 0.0
    %1965 = vmatpush1.msra.mxu0 0.0
    %1966 = vmatprep.subr.mxu0 0.0
    %1967 = vmatpush1.msra.mxu0 0.0
    %1968 = vmatprep.subr.mxu0 0.0
    %1969 = vmatpush1.msra.mxu0 0.0
    %1970 = vmatprep.subr.mxu0 0.0
    %1971 = vmatpush1.msra.mxu0 0.0
    %1972 = vmatprep.subr.mxu0 0.0
    %1973 = vmatpush1.msra.mxu0 0.0
    %1974 = vmatprep.subr.mxu0 0.0
    %1975 = vmatpush1.msra.mxu0 0.0
    %1976 = vmatprep.subr.mxu0 0.0
    %1977 = vmatpush1.msra.mxu0 0.0
    %1978 = vmatprep.subr.mxu0 0.0
    %1979 = vmatpush1.msra.mxu0 0.0
    %1980 = vmatprep.subr.mxu0 0.0
    %1981 = vmatpush1.msra.mxu0 0.0
    %1982 = vmatprep.subr.mxu0 0.0
    %1983 = vmatpush1.msra.mxu0 0.0
    %1984 = vmatprep.subr.mxu0 0.0
    %1985 = vmatpush1.msra.mxu0 0.0
    %1986 = vmatprep.subr.mxu0 0.0
    %1987 = vmatpush1.msra.mxu0 0.0
    %1988 = vmatprep.subr.mxu0 0.0
    %1989 = vmatpush1.msra.mxu0 0.0
    %1990 = vmatprep.subr.mxu0 0.0
    %1991 = vmatpush1.msra.mxu0 0.0
    %1992 = vmatprep.subr.mxu0 0.0
    %1993 = vmatpush1.msra.mxu0 0.0
    %1994 = vmatprep.subr.mxu0 0.0
    %1995 = vmatpush1.msra.mxu0 0.0
    %1996 = vmatprep.mubr.f32.mxu0 0.0
    %1997 = vmatmul.mubr.f32.gmra.mrb[0].mxu0 %v1930
    %v1998 = vpop.f32.mrb[0].mxu0
    %v1999 = vadd.f32 0.0, %v1998
    %v2000 = vpop.f32.mrb[0].mxu0
    %2001 = vdwg.mxu0
    %vm2002 = vcmp.gt.f32.partialorder %v1999, 0.0
    %v2003 = vmin.f32 %v1999, 0.0
    %v2004 = vmul.f32 %v2003, 1.442695
    %v2005 = vpow.pop %v2004
    %v2006 = vsub.f32 %v2005, 1.0
    %v2007 = vsel %vm2002, %v1999, %v2006
    %v2008 = vld [vmem:[%s8] sm:$0xff]
    %v2009 = vld [vmem:[%s8 + $0x8] sm:$0xff]
    %v2011 = vsel %vm1795, %v2007, 0
    %2013 = vmatprep.subr.mxu0 0.0
    %2014 = vmatpush1.msra.mxu0 %v2008
    %2015 = vmatprep.subr.mxu0 0.0
    %2016 = vmatpush1.msra.mxu0 %v2009
    %2017 = vmatprep.subr.mxu0 0.0
    %2018 = vmatpush1.msra.mxu0 0.0
    %2019 = vmatprep.subr.mxu0 0.0
    %2020 = vmatpush1.msra.mxu0 0.0
    %2021 = vmatprep.subr.mxu0 0.0
    %2022 = vmatpush1.msra.mxu0 0.0
    %2023 = vmatprep.subr.mxu0 0.0
    %2024 = vmatpush1.msra.mxu0 0.0
    %2025 = vmatprep.subr.mxu0 0.0
    %2026 = vmatpush1.msra.mxu0 0.0
    %2027 = vmatprep.subr.mxu0 0.0
    %2028 = vmatpush1.msra.mxu0 0.0
    %2029 = vmatprep.subr.mxu0 0.0
    %2030 = vmatpush1.msra.mxu0 0.0
    %2031 = vmatprep.subr.mxu0 0.0
    %2032 = vmatpush1.msra.mxu0 0.0
    %2033 = vmatprep.subr.mxu0 0.0
    %2034 = vmatpush1.msra.mxu0 0.0
    %2035 = vmatprep.subr.mxu0 0.0
    %2036 = vmatpush1.msra.mxu0 0.0
    %2037 = vmatprep.subr.mxu0 0.0
    %2038 = vmatpush1.msra.mxu0 0.0
    %2039 = vmatprep.subr.mxu0 0.0
    %2040 = vmatpush1.msra.mxu0 0.0
    %2041 = vmatprep.subr.mxu0 0.0
    %2042 = vmatpush1.msra.mxu0 0.0
    %2043 = vmatprep.subr.mxu0 0.0
    %2044 = vmatpush1.msra.mxu0 0.0
    %2045 = vmatprep.subr.mxu0 0.0
    %2046 = vmatpush1.msra.mxu0 0.0
    %2047 = vmatprep.subr.mxu0 0.0
    %2048 = vmatpush1.msra.mxu0 0.0
    %2049 = vmatprep.subr.mxu0 0.0
    %2050 = vmatpush1.msra.mxu0 0.0
    %2051 = vmatprep.subr.mxu0 0.0
    %2052 = vmatpush1.msra.mxu0 0.0
    %2053 = vmatprep.subr.mxu0 0.0
    %2054 = vmatpush1.msra.mxu0 0.0
    %2055 = vmatprep.subr.mxu0 0.0
    %2056 = vmatpush1.msra.mxu0 0.0
    %2057 = vmatprep.subr.mxu0 0.0
    %2058 = vmatpush1.msra.mxu0 0.0
    %2059 = vmatprep.subr.mxu0 0.0
    %2060 = vmatpush1.msra.mxu0 0.0
    %2061 = vmatprep.subr.mxu0 0.0
    %2062 = vmatpush1.msra.mxu0 0.0
    %2063 = vmatprep.subr.mxu0 0.0
    %2064 = vmatpush1.msra.mxu0 0.0
    %2065 = vmatprep.subr.mxu0 0.0
    %2066 = vmatpush1.msra.mxu0 0.0
    %2067 = vmatprep.subr.mxu0 0.0
    %2068 = vmatpush1.msra.mxu0 0.0
    %2069 = vmatprep.subr.mxu0 0.0
    %2070 = vmatpush1.msra.mxu0 0.0
    %2071 = vmatprep.subr.mxu0 0.0
    %2072 = vmatpush1.msra.mxu0 0.0
    %2073 = vmatprep.subr.mxu0 0.0
    %2074 = vmatpush1.msra.mxu0 0.0
    %2075 = vmatprep.subr.mxu0 0.0
    %2076 = vmatpush1.msra.mxu0 0.0
    %2077 = vmatprep.mubr.f32.mxu0 0.0
    %2078 = vmatmul.mubr.f32.gmra.mrb[0].mxu0 %v2011
    %v2079 = vpop.f32.mrb[0].mxu0
    %v2080 = vadd.f32 0.0, %v2079
    %v2081 = vpop.f32.mrb[0].mxu0
    %2082 = vdwg.mxu0
    %v2083 = vld [vmem:[%s9] sm:$0xff]
    %v2084 = vld [vmem:[%s9 + $0x8] sm:$0xff]
    %v2086 = vsel %vm1795, %v2080, 0
    %2088 = vmatprep.subr.mxu0 0.0
    %2089 = vmatpush1.msra.mxu0 %v2083
    %2090 = vmatprep.subr.mxu0 0.0
    %2091 = vmatpush1.msra.mxu0 %v2084
    %2092 = vmatprep.subr.mxu0 0.0
    %2093 = vmatpush1.msra.mxu0 0.0
    %2094 = vmatprep.subr.mxu0 0.0
    %2095 = vmatpush1.msra.mxu0 0.0
    %2096 = vmatprep.subr.mxu0 0.0
    %2097 = vmatpush1.msra.mxu0 0.0
    %2098 = vmatprep.subr.mxu0 0.0
    %2099 = vmatpush1.msra.mxu0 0.0
    %2100 = vmatprep.subr.mxu0 0.0
    %2101 = vmatpush1.msra.mxu0 0.0
    %2102 = vmatprep.subr.mxu0 0.0
    %2103 = vmatpush1.msra.mxu0 0.0
    %2104 = vmatprep.subr.mxu0 0.0
    %2105 = vmatpush1.msra.mxu0 0.0
    %2106 = vmatprep.subr.mxu0 0.0
    %2107 = vmatpush1.msra.mxu0 0.0
    %2108 = vmatprep.subr.mxu0 0.0
    %2109 = vmatpush1.msra.mxu0 0.0
    %2110 = vmatprep.subr.mxu0 0.0
    %2111 = vmatpush1.msra.mxu0 0.0
    %2112 = vmatprep.subr.mxu0 0.0
    %2113 = vmatpush1.msra.mxu0 0.0
    %2114 = vmatprep.subr.mxu0 0.0
    %2115 = vmatpush1.msra.mxu0 0.0
    %2116 = vmatprep.subr.mxu0 0.0
    %2117 = vmatpush1.msra.mxu0 0.0
    %2118 = vmatprep.subr.mxu0 0.0
    %2119 = vmatpush1.msra.mxu0 0.0
    %2120 = vmatprep.subr.mxu0 0.0
    %2121 = vmatpush1.msra.mxu0 0.0
    %2122 = vmatprep.subr.mxu0 0.0
    %2123 = vmatpush1.msra.mxu0 0.0
    %2124 = vmatprep.subr.mxu0 0.0
    %2125 = vmatpush1.msra.mxu0 0.0
    %2126 = vmatprep.subr.mxu0 0.0
    %2127 = vmatpush1.msra.mxu0 0.0
    %2128 = vmatprep.subr.mxu0 0.0
    %2129 = vmatpush1.msra.mxu0 0.0
    %2130 = vmatprep.subr.mxu0 0.0
    %2131 = vmatpush1.msra.mxu0 0.0
    %2132 = vmatprep.subr.mxu0 0.0
    %2133 = vmatpush1.msra.mxu0 0.0
    %2134 = vmatprep.subr.mxu0 0.0
    %2135 = vmatpush1.msra.mxu0 0.0
    %2136 = vmatprep.subr.mxu0 0.0
    %2137 = vmatpush1.msra.mxu0 0.0
    %2138 = vmatprep.subr.mxu0 0.0
    %2139 = vmatpush1.msra.mxu0 0.0
    %2140 = vmatprep.subr.mxu0 0.0
    %2141 = vmatpush1.msra.mxu0 0.0
    %2142 = vmatprep.subr.mxu0 0.0
    %2143 = vmatpush1.msra.mxu0 0.0
    %2144 = vmatprep.subr.mxu0 0.0
    %2145 = vmatpush1.msra.mxu0 0.0
    %2146 = vmatprep.subr.mxu0 0.0
    %2147 = vmatpush1.msra.mxu0 0.0
    %2148 = vmatprep.subr.mxu0 0.0
    %2149 = vmatpush1.msra.mxu0 0.0
    %2150 = vmatprep.subr.mxu0 0.0
    %2151 = vmatpush1.msra.mxu0 0.0
    %2152 = vmatprep.mubr.f32.mxu0 0.0
    %2153 = vmatmul.mubr.f32.gmra.mrb[0].mxu0 %v2086
    %v2154 = vpop.f32.mrb[0].mxu0
    %v2155 = vadd.f32 0.0, %v2154
    %v2156 = vpop.f32.mrb[0].mxu0
    %2157 = vdwg.mxu0
    %2159 = vrot.lane.b32.xlu0 %v2155, 127
    %v2160 = vpop.permute.xlu0 %2159
    %2162 = vxpose.xlu0.b32.start [1/16] %v2160, 128
    %2163 = vxpose.xlu0.b32.cont [2/16] 0.0, 128
    %2164 = vxpose.xlu0.b32.cont [3/16] 0.0, 128
    %2165 = vxpose.xlu0.b32.cont [4/16] 0.0, 128
    %2166 = vxpose.xlu0.b32.cont [5/16] 0.0, 128
    %2167 = vxpose.xlu0.b32.cont [6/16] 0.0, 128
    %2168 = vxpose.xlu0.b32.cont [7/16] 0.0, 128
    %2169 = vxpose.xlu0.b32.cont [8/16] 0.0, 128
    %2170 = vxpose.xlu0.b32.cont [9/16] 0.0, 128
    %2171 = vxpose.xlu0.b32.cont [10/16] 0.0, 128
    %2172 = vxpose.xlu0.b32.cont [11/16] 0.0, 128
    %2173 = vxpose.xlu0.b32.cont [12/16] 0.0, 128
    %2174 = vxpose.xlu0.b32.cont [13/16] 0.0, 128
    %2175 = vxpose.xlu0.b32.cont [14/16] 0.0, 128
    %2176 = vxpose.xlu0.b32.cont [15/16] 0.0, 128
    %2177 = vxpose.xlu0.b32.end [16/16] 0.0, 128
    %v2178 = vpop.trf.xlu0
    %v2179 = vpop.trf.xlu0
    %v2180 = vpop.trf.xlu0
    %v2181 = vpop.trf.xlu0
    %v2182 = vpop.trf.xlu0
    %v2183 = vpop.trf.xlu0
    %v2184 = vpop.trf.xlu0
    %v2185 = vpop.trf.xlu0
    %v2186 = vpop.trf.xlu0
    %v2187 = vpop.trf.xlu0
    %v2188 = vpop.trf.xlu0
    %v2189 = vpop.trf.xlu0
    %v2190 = vpop.trf.xlu0
    %v2191 = vpop.trf.xlu0
    %v2192 = vpop.trf.xlu0
    %v2193 = vpop.trf.xlu0
    %2194 = vset.pattern.permute.xlu0 0
    %2195 = vperm.xlu0 %2194, %v2155
    %v2196 = vpop.permute.xlu0 %2195
    %v2198 = vlaneseq
    %v2199 = vshrl.u32 %v2198, 7
    %v2200 = vsub.s32 0, %v2199
    %v2201 = vrot.slane %v2178, %v2200
    %v2202 = vadd.f32 %v2196, %v2201
    %vm2203 = vcmp.gt.f32.partialorder %v2202, 0.0
    %v2204 = vmul.f32 %v2202, 0.2
    %v2205 = vsel %vm2203, %v2202, %v2204
    %v2206 = vadd.f32 %v2205, %v38
    %v2207 = vsel %vm119, %v2206, -inf
    %2208 = vmax.xlane.f32.xlu0 %v2207
    %v2209 = vpop.xlane.xlu0 %2208
    %v2210 = vsub.f32 %v2206, %v2209
    %v2211 = vmul.f32 %v2210, 1.442695
    %v2212 = vpow.pop %v2211
    %v2213 = vsel %vm119, %v2212, 0.0
    %2214 = vadd.xlane.f32.xlu0 %v2213
    %v2215 = vpop.xlane.xlu0 %2214
    %v2216 = vrcp.pop %v2215
    %v2217 = vmul.f32 %v2212, %v2216
    %v2219 = vsel %vm119, %v2217, 0
    %2221 = vmatprep.subr.mxu0 0.0
    %2222 = vmatpush1.msra.mxu0 %v2080
    %2223 = vmatprep.subr.mxu0 0.0
    %2224 = vmatpush1.msra.mxu0 0.0
    %2225 = vmatprep.subr.mxu0 0.0
    %2226 = vmatpush1.msra.mxu0 0.0
    %2227 = vmatprep.subr.mxu0 0.0
    %2228 = vmatpush1.msra.mxu0 0.0
    %2229 = vmatprep.subr.mxu0 0.0
    %2230 = vmatpush1.msra.mxu0 0.0
    %2231 = vmatprep.subr.mxu0 0.0
    %2232 = vmatpush1.msra.mxu0 0.0
    %2233 = vmatprep.subr.mxu0 0.0
    %2234 = vmatpush1.msra.mxu0 0.0
    %2235 = vmatprep.subr.mxu0 0.0
    %2236 = vmatpush1.msra.mxu0 0.0
    %2237 = vmatprep.subr.mxu0 0.0
    %2238 = vmatpush1.msra.mxu0 0.0
    %2239 = vmatprep.subr.mxu0 0.0
    %2240 = vmatpush1.msra.mxu0 0.0
    %2241 = vmatprep.subr.mxu0 0.0
    %2242 = vmatpush1.msra.mxu0 0.0
    %2243 = vmatprep.subr.mxu0 0.0
    %2244 = vmatpush1.msra.mxu0 0.0
    %2245 = vmatprep.subr.mxu0 0.0
    %2246 = vmatpush1.msra.mxu0 0.0
    %2247 = vmatprep.subr.mxu0 0.0
    %2248 = vmatpush1.msra.mxu0 0.0
    %2249 = vmatprep.subr.mxu0 0.0
    %2250 = vmatpush1.msra.mxu0 0.0
    %2251 = vmatprep.subr.mxu0 0.0
    %2252 = vmatpush1.msra.mxu0 0.0
    %2253 = vmatprep.subr.mxu0 0.0
    %2254 = vmatpush1.msra.mxu0 0.0
    %2255 = vmatprep.subr.mxu0 0.0
    %2256 = vmatpush1.msra.mxu0 0.0
    %2257 = vmatprep.subr.mxu0 0.0
    %2258 = vmatpush1.msra.mxu0 0.0
    %2259 = vmatprep.subr.mxu0 0.0
    %2260 = vmatpush1.msra.mxu0 0.0
    %2261 = vmatprep.subr.mxu0 0.0
    %2262 = vmatpush1.msra.mxu0 0.0
    %2263 = vmatprep.subr.mxu0 0.0
    %2264 = vmatpush1.msra.mxu0 0.0
    %2265 = vmatprep.subr.mxu0 0.0
    %2266 = vmatpush1.msra.mxu0 0.0
    %2267 = vmatprep.subr.mxu0 0.0
    %2268 = vmatpush1.msra.mxu0 0.0
    %2269 = vmatprep.subr.mxu0 0.0
    %2270 = vmatpush1.msra.mxu0 0.0
    %2271 = vmatprep.subr.mxu0 0.0
    %2272 = vmatpush1.msra.mxu0 0.0
    %2273 = vmatprep.subr.mxu0 0.0
    %2274 = vmatpush1.msra.mxu0 0.0
    %2275 = vmatprep.subr.mxu0 0.0
    %2276 = vmatpush1.msra.mxu0 0.0
    %2277 = vmatprep.subr.mxu0 0.0
    %2278 = vmatpush1.msra.mxu0 0.0
    %2279 = vmatprep.subr.mxu0 0.0
    %2280 = vmatpush1.msra.mxu0 0.0
    %2281 = vmatprep.subr.mxu0 0.0
    %2282 = vmatpush1.msra.mxu0 0.0
    %2283 = vmatprep.subr.mxu0 0.0
    %2284 = vmatpush1.msra.mxu0 0.0
    %2285 = vmatprep.mubr.f32.mxu0 0.0
    %2286 = vmatmul.mubr.f32.gmra.mrb[0].mxu0 %v2219
    %v2287 = vpop.f32.mrb[0].mxu0
    %v2288 = vadd.f32 0.0, %v2287
    %v2289 = vpop.f32.mrb[0].mxu0
    %2290 = vdwg.mxu0
    %vm2291 = vcmp.gt.f32.partialorder %v2288, 0.0
    %v2292 = vmin.f32 %v2288, 0.0
    %v2293 = vmul.f32 %v2292, 1.442695
    %v2294 = vpow.pop %v2293
    %v2295 = vsub.f32 %v2294, 1.0
    %v2296 = vsel %vm2291, %v2288, %v2295
    %2297 = vst.msk [vmem:[#allocation2] sm:$0xff] %vm1795, %v2296
    // Predicated region
    $region42: #{tpu_custom_call.1} parent=1 // pred_check
      _
    $region43: #{tpu_custom_call.1} parent=1 // pred_check_branch
      %2299 = sbr.rel (0) target = $region45
    $region44: #{tpu_custom_call.1} parent=1 // pred_region
      %s2301 = ssub.s32 128, 128
      %2302 = vsyncadd [#allocation3], %s2301
      %s2304 = sshll.u32 [#allocation2], 4
      %s2305 = int_to_ptr.vmem [resolvable:$true] %s2304
      %2307 = dma.vmem_to_hbm [thread:$0]  %s2305, 128, %s10, [#allocation3]
    $region45: #{tpu_custom_call.1} parent=1 // pred_fallthru
      _
    // Predicated region
    $region46: #{tpu_custom_call.1} parent=1 // pred_check
      _
    $region47: #{tpu_custom_call.1} parent=1 // pred_check_branch
      %2309 = sbr.rel (0) target = $region49
    $region48: #{tpu_custom_call.1} parent=1 // pred_region
      %2310 = dma.done [#allocation3], 128
    $region49: #{tpu_custom_call.1} parent=1 // pred_fallthru
      _
    %2311 = vsyncpa [#allocation3], 1

</llo_original>
